<compile_context>
chip_gen: v6e
topology: v6e:2x2x1
jax: 0.10.0
libtpu: 0.0.40
codegen_flags: <defaults>
</compile_context>

<pallas_src>
import math

import jax
import jax.numpy as jnp
from jax.experimental import pallas as pl
from jax.experimental.pallas import tpu as pltpu


def make_fused_rnn_kernel(num_layers, seq_len, batch, hidden):
    """Build a fused kernel closed over the static problem sizes."""
    L, S, B, H = num_layers, seq_len, batch, hidden

    def kernel(*refs):
        # refs layout: x, W_ih^T[0..L-1], W_hh^T[0..L-1], bias[0..L-1], out, hn
        x_ref = refs[0]                       # (S*B, F)       VMEM
        w_refs = refs[1:1 + L]                # (F_in, H) each VMEM
        u_refs = refs[1 + L:1 + 2 * L]        # (H, H)    each VMEM
        b_refs = refs[1 + 2 * L:1 + 3 * L]    # (1, H)    each VMEM
        out_ref = refs[1 + 3 * L]             # (S*B, H)       output
        hn_ref = refs[2 + 3 * L]              # (L*B, H)       output

        cur = x_ref[...].astype(jnp.float32)  # (S*B, F_in)

        for l in range(L):
            w = w_refs[l][...].astype(jnp.float32)   # (F_in, H)
            u = u_refs[l][...].astype(jnp.float32)   # (H, H)
            b = b_refs[l][...].astype(jnp.float32)   # (1, H)

            # Hoisted input projection: one MXU push for the whole sequence.
            xp = jnp.dot(cur, w, preferred_element_type=jnp.float32) + b  # (S*B, H)

            # Sequential recurrence, fully unrolled (S is small & static).
            h = jnp.zeros((B, H), jnp.float32)
            rows = []
            for t in range(S):
                pre = xp[t * B:(t + 1) * B, :] + jnp.dot(
                    h, u, preferred_element_type=jnp.float32)
                h = jnp.tanh(pre)
                rows.append(h)

            cur = jnp.concatenate(rows, axis=0)       # (S*B, H) -> next layer
            # Final hidden state for this layer, written once.
            hn_ref[l * B:(l + 1) * B, :] = h.astype(hn_ref.dtype)

        # Single writeback of the last layer's full output sequence.
        out_ref[...] = cur.astype(out_ref.dtype)

    return kernel


def rnn_forward(x, params):
    """Multi-layer tanh RNN forward via one fused Pallas kernel.

    x: (S, B, F); params: list of (W_ih, W_hh, b_ih, b_hh) with PyTorch shapes.
    Returns (output (S,B,H), h_n (num_layers,B,H)) like torch.nn.RNN."""
    S, B, F = x.shape
    H = params[0][0].shape[0]
    L = len(params)

    # Pre-pack weights once (transpose + bias sum live outside the kernel).
    w_list = [jnp.asarray(w_ih).T for (w_ih, _, _, _) in params]            # (F_in, H)
    u_list = [jnp.asarray(w_hh).T for (_, w_hh, _, _) in params]            # (H, H)
    b_list = [(b_ih + b_hh).reshape(1, H).astype(jnp.float32)
              for (_, _, b_ih, b_hh) in params]                             # (1, H)

    kernel = make_fused_rnn_kernel(L, S, B, H)
    vmem = pl.BlockSpec(memory_space=pltpu.MemorySpace.VMEM)

    out2, hn2 = pl.pallas_call(
        kernel,
        out_shape=(
            jax.ShapeDtypeStruct((S * B, H), x.dtype),
            jax.ShapeDtypeStruct((L * B, H), x.dtype),
        ),
        in_specs=[vmem] * (1 + 3 * L),
        out_specs=(vmem, vmem),
    )(x.reshape(S * B, F), *w_list, *u_list, *b_list)

    return out2.reshape(S, B, H), hn2.reshape(L, B, H)


def make_rnn_params(key, feature_size, hidden_size, num_layers):
    """torch.nn.RNN-shaped params: W_ih_l0 (H,F), W_ih_l{k>0} (H,H), W_hh (H,H),
       biases (H,). PyTorch init: uniform(-1/sqrt(H), 1/sqrt(H))."""
    bound = 1.0 / math.sqrt(hidden_size)
    params = []
    for layer in range(num_layers):
        in_size = feature_size if layer == 0 else hidden_size
        key, k1, k2, k3, k4 = jax.random.split(key, 5)
        w_ih = jax.random.uniform(k1, (hidden_size, in_size), jnp.float32, -bound, bound)
        w_hh = jax.random.uniform(k2, (hidden_size, hidden_size), jnp.float32, -bound, bound)
        b_ih = jax.random.uniform(k3, (hidden_size,), jnp.float32, -bound, bound)
        b_hh = jax.random.uniform(k4, (hidden_size,), jnp.float32, -bound, bound)
        params.append((w_ih, w_hh, b_ih, b_hh))
    return params


def rnn_forward_ref(x, params):
    """Pure-JAX reference (lax.scan) for correctness checking."""
    layer_in = x
    h_ns = []
    for (w_ih, w_hh, b_ih, b_hh) in params:
        H = w_ih.shape[0]
        B = x.shape[1]
        h0 = jnp.zeros((B, H), jnp.float32)

        def step(h, x_t):
            h_new = jnp.tanh(x_t @ w_ih.T + b_ih + h @ w_hh.T + b_hh)
            return h_new, h_new

        h_last, outs = jax.lax.scan(step, h0, layer_in)
        h_ns.append(h_last)
        layer_in = outs
    return layer_in, jnp.stack(h_ns, axis=0)


if __name__ == "__main__":
    # Shapes consistent with the module: feature_size=8, hidden_layer=[32, 2]
    feature_size = 8
    hidden_size = 32
    num_layers = 2
    seq_len = 8
    batch = 2

    key = jax.random.PRNGKey(0)
    key, kx = jax.random.split(key)
    x = jax.random.normal(kx, (seq_len, batch, feature_size), jnp.float32)
    params = make_rnn_params(key, feature_size, hidden_size, num_layers)

    out, h_n = rnn_forward(x, params)
    out = jax.block_until_ready(out)
    h_n = jax.block_until_ready(h_n)

    # sanity check against pure-JAX reference
    out_ref, h_n_ref = rnn_forward_ref(x, params)
    assert out.shape == (seq_len, batch, hidden_size)
    assert h_n.shape == (num_layers, batch, hidden_size)
    assert jnp.allclose(out, out_ref, rtol=1e-5, atol=1e-5)
    assert jnp.allclose(h_n, h_n_ref, rtol=1e-5, atol=1e-5)

    print("KERNEL_OK")
</pallas_src>

<mosaic_0001>
module attributes {stable_mosaic.version = 11 : i64} {
  func.func @kernel(%arg0: memref<16x8xf32, #tpu.memory_space<vmem>>, %arg1: memref<8x32xf32, #tpu.memory_space<vmem>>, %arg2: memref<32x32xf32, #tpu.memory_space<vmem>>, %arg3: memref<32x32xf32, #tpu.memory_space<vmem>>, %arg4: memref<32x32xf32, #tpu.memory_space<vmem>>, %arg5: memref<1x32xf32, #tpu.memory_space<vmem>>, %arg6: memref<1x32xf32, #tpu.memory_space<vmem>>, %arg7: memref<16x32xf32, #tpu.memory_space<vmem>>, %arg8: memref<4x32xf32, #tpu.memory_space<vmem>>) attributes {dimension_semantics = [], scalar_prefetch = 0 : i64, scratch_operands = 0 : i64, tpu.core_type = #tpu.core_type<tc>} {
    %c0 = arith.constant 0 : index
    %c0_0 = arith.constant 0 : index
    %0 = vector.load %arg0[%c0, %c0_0] : memref<16x8xf32, #tpu.memory_space<vmem>>, vector<16x8xf32>
    %c0_1 = arith.constant 0 : index
    %c0_2 = arith.constant 0 : index
    %1 = vector.load %arg1[%c0_1, %c0_2] : memref<8x32xf32, #tpu.memory_space<vmem>>, vector<8x32xf32>
    %c0_3 = arith.constant 0 : index
    %c0_4 = arith.constant 0 : index
    %2 = vector.load %arg3[%c0_3, %c0_4] : memref<32x32xf32, #tpu.memory_space<vmem>>, vector<32x32xf32>
    %c0_5 = arith.constant 0 : index
    %c0_6 = arith.constant 0 : index
    %3 = vector.load %arg5[%c0_5, %c0_6] : memref<1x32xf32, #tpu.memory_space<vmem>>, vector<1x32xf32>
    %cst = arith.constant dense<0.000000e+00> : vector<16x32xf32>
    %4 = tpu.matmul %0, %1, %cst {dimension_numbers = #tpu.dot_dimension_numbers<[1], [0], [0], [1], [0, 0, 1, 1], [], []>} : vector<16x8xf32>, vector<8x32xf32>, vector<16x32xf32> -> vector<16x32xf32>
    %5 = vector.broadcast %3 : vector<1x32xf32> to vector<16x32xf32>
    %6 = arith.addf %4, %5 : vector<16x32xf32>
    %cst_7 = arith.constant 0.000000e+00 : f32
    %7 = vector.broadcast %cst_7 : f32 to vector<2x32xf32>
    %8 = vector.extract_strided_slice %6 {offsets = [0, 0], sizes = [2, 32], strides = [1, 1]} : vector<16x32xf32> to vector<2x32xf32>
    %cst_8 = arith.constant dense<0.000000e+00> : vector<2x32xf32>
    %9 = tpu.matmul %7, %2, %cst_8 {dimension_numbers = #tpu.dot_dimension_numbers<[1], [0], [0], [1], [0, 0, 1, 1], [], []>} : vector<2x32xf32>, vector<32x32xf32>, vector<2x32xf32> -> vector<2x32xf32>
    %10 = arith.addf %8, %9 : vector<2x32xf32>
    %11 = math.tanh %10 : vector<2x32xf32>
    %12 = vector.extract_strided_slice %6 {offsets = [2, 0], sizes = [2, 32], strides = [1, 1]} : vector<16x32xf32> to vector<2x32xf32>
    %cst_9 = arith.constant dense<0.000000e+00> : vector<2x32xf32>
    %13 = tpu.matmul %11, %2, %cst_9 {dimension_numbers = #tpu.dot_dimension_numbers<[1], [0], [0], [1], [0, 0, 1, 1], [], []>} : vector<2x32xf32>, vector<32x32xf32>, vector<2x32xf32> -> vector<2x32xf32>
    %14 = arith.addf %12, %13 : vector<2x32xf32>
    %15 = math.tanh %14 : vector<2x32xf32>
    %16 = vector.extract_strided_slice %6 {offsets = [4, 0], sizes = [2, 32], strides = [1, 1]} : vector<16x32xf32> to vector<2x32xf32>
    %cst_10 = arith.constant dense<0.000000e+00> : vector<2x32xf32>
    %17 = tpu.matmul %15, %2, %cst_10 {dimension_numbers = #tpu.dot_dimension_numbers<[1], [0], [0], [1], [0, 0, 1, 1], [], []>} : vector<2x32xf32>, vector<32x32xf32>, vector<2x32xf32> -> vector<2x32xf32>
    %18 = arith.addf %16, %17 : vector<2x32xf32>
    %19 = math.tanh %18 : vector<2x32xf32>
    %20 = vector.extract_strided_slice %6 {offsets = [6, 0], sizes = [2, 32], strides = [1, 1]} : vector<16x32xf32> to vector<2x32xf32>
    %cst_11 = arith.constant dense<0.000000e+00> : vector<2x32xf32>
    %21 = tpu.matmul %19, %2, %cst_11 {dimension_numbers = #tpu.dot_dimension_numbers<[1], [0], [0], [1], [0, 0, 1, 1], [], []>} : vector<2x32xf32>, vector<32x32xf32>, vector<2x32xf32> -> vector<2x32xf32>
    %22 = arith.addf %20, %21 : vector<2x32xf32>
    %23 = math.tanh %22 : vector<2x32xf32>
    %24 = vector.extract_strided_slice %6 {offsets = [8, 0], sizes = [2, 32], strides = [1, 1]} : vector<16x32xf32> to vector<2x32xf32>
    %cst_12 = arith.constant dense<0.000000e+00> : vector<2x32xf32>
    %25 = tpu.matmul %23, %2, %cst_12 {dimension_numbers = #tpu.dot_dimension_numbers<[1], [0], [0], [1], [0, 0, 1, 1], [], []>} : vector<2x32xf32>, vector<32x32xf32>, vector<2x32xf32> -> vector<2x32xf32>
    %26 = arith.addf %24, %25 : vector<2x32xf32>
    %27 = math.tanh %26 : vector<2x32xf32>
    %28 = vector.extract_strided_slice %6 {offsets = [10, 0], sizes = [2, 32], strides = [1, 1]} : vector<16x32xf32> to vector<2x32xf32>
    %cst_13 = arith.constant dense<0.000000e+00> : vector<2x32xf32>
    %29 = tpu.matmul %27, %2, %cst_13 {dimension_numbers = #tpu.dot_dimension_numbers<[1], [0], [0], [1], [0, 0, 1, 1], [], []>} : vector<2x32xf32>, vector<32x32xf32>, vector<2x32xf32> -> vector<2x32xf32>
    %30 = arith.addf %28, %29 : vector<2x32xf32>
    %31 = math.tanh %30 : vector<2x32xf32>
    %32 = vector.extract_strided_slice %6 {offsets = [12, 0], sizes = [2, 32], strides = [1, 1]} : vector<16x32xf32> to vector<2x32xf32>
    %cst_14 = arith.constant dense<0.000000e+00> : vector<2x32xf32>
    %33 = tpu.matmul %31, %2, %cst_14 {dimension_numbers = #tpu.dot_dimension_numbers<[1], [0], [0], [1], [0, 0, 1, 1], [], []>} : vector<2x32xf32>, vector<32x32xf32>, vector<2x32xf32> -> vector<2x32xf32>
    %34 = arith.addf %32, %33 : vector<2x32xf32>
    %35 = math.tanh %34 : vector<2x32xf32>
    %36 = vector.extract_strided_slice %6 {offsets = [14, 0], sizes = [2, 32], strides = [1, 1]} : vector<16x32xf32> to vector<2x32xf32>
    %cst_15 = arith.constant dense<0.000000e+00> : vector<2x32xf32>
    %37 = tpu.matmul %35, %2, %cst_15 {dimension_numbers = #tpu.dot_dimension_numbers<[1], [0], [0], [1], [0, 0, 1, 1], [], []>} : vector<2x32xf32>, vector<32x32xf32>, vector<2x32xf32> -> vector<2x32xf32>
    %38 = arith.addf %36, %37 : vector<2x32xf32>
    %39 = math.tanh %38 : vector<2x32xf32>
    %40 = tpu.concatenate %11, %15, %19, %23, %27, %31, %35, %39 in 0 : vector<2x32xf32>, vector<2x32xf32>, vector<2x32xf32>, vector<2x32xf32>, vector<2x32xf32>, vector<2x32xf32>, vector<2x32xf32>, vector<2x32xf32> -> vector<16x32xf32>
    %c0_16 = arith.constant 0 : index
    %c0_17 = arith.constant 0 : index
    %41 = vector.load %arg8[%c0_16, %c0_17] : memref<4x32xf32, #tpu.memory_space<vmem>>, vector<2x32xf32>
    tpu.vector_store %arg8[%c0_16, %c0_17], %39 {strides = array<i32>} : memref<4x32xf32, #tpu.memory_space<vmem>>, vector<2x32xf32>,
    %c0_18 = arith.constant 0 : index
    %c0_19 = arith.constant 0 : index
    %42 = vector.load %arg2[%c0_18, %c0_19] : memref<32x32xf32, #tpu.memory_space<vmem>>, vector<32x32xf32>
    %c0_20 = arith.constant 0 : index
    %c0_21 = arith.constant 0 : index
    %43 = vector.load %arg4[%c0_20, %c0_21] : memref<32x32xf32, #tpu.memory_space<vmem>>, vector<32x32xf32>
    %c0_22 = arith.constant 0 : index
    %c0_23 = arith.constant 0 : index
    %44 = vector.load %arg6[%c0_22, %c0_23] : memref<1x32xf32, #tpu.memory_space<vmem>>, vector<1x32xf32>
    %cst_24 = arith.constant dense<0.000000e+00> : vector<16x32xf32>
    %45 = tpu.matmul %40, %42, %cst_24 {dimension_numbers = #tpu.dot_dimension_numbers<[1], [0], [0], [1], [0, 0, 1, 1], [], []>} : vector<16x32xf32>, vector<32x32xf32>, vector<16x32xf32> -> vector<16x32xf32>
    %46 = vector.broadcast %44 : vector<1x32xf32> to vector<16x32xf32>
    %47 = arith.addf %45, %46 : vector<16x32xf32>
    %cst_25 = arith.constant 0.000000e+00 : f32
    %48 = vector.broadcast %cst_25 : f32 to vector<2x32xf32>
    %49 = vector.extract_strided_slice %47 {offsets = [0, 0], sizes = [2, 32], strides = [1, 1]} : vector<16x32xf32> to vector<2x32xf32>
    %cst_26 = arith.constant dense<0.000000e+00> : vector<2x32xf32>
    %50 = tpu.matmul %48, %43, %cst_26 {dimension_numbers = #tpu.dot_dimension_numbers<[1], [0], [0], [1], [0, 0, 1, 1], [], []>} : vector<2x32xf32>, vector<32x32xf32>, vector<2x32xf32> -> vector<2x32xf32>
    %51 = arith.addf %49, %50 : vector<2x32xf32>
    %52 = math.tanh %51 : vector<2x32xf32>
    %53 = vector.extract_strided_slice %47 {offsets = [2, 0], sizes = [2, 32], strides = [1, 1]} : vector<16x32xf32> to vector<2x32xf32>
    %cst_27 = arith.constant dense<0.000000e+00> : vector<2x32xf32>
    %54 = tpu.matmul %52, %43, %cst_27 {dimension_numbers = #tpu.dot_dimension_numbers<[1], [0], [0], [1], [0, 0, 1, 1], [], []>} : vector<2x32xf32>, vector<32x32xf32>, vector<2x32xf32> -> vector<2x32xf32>
    %55 = arith.addf %53, %54 : vector<2x32xf32>
    %56 = math.tanh %55 : vector<2x32xf32>
    %57 = vector.extract_strided_slice %47 {offsets = [4, 0], sizes = [2, 32], strides = [1, 1]} : vector<16x32xf32> to vector<2x32xf32>
    %cst_28 = arith.constant dense<0.000000e+00> : vector<2x32xf32>
    %58 = tpu.matmul %56, %43, %cst_28 {dimension_numbers = #tpu.dot_dimension_numbers<[1], [0], [0], [1], [0, 0, 1, 1], [], []>} : vector<2x32xf32>, vector<32x32xf32>, vector<2x32xf32> -> vector<2x32xf32>
    %59 = arith.addf %57, %58 : vector<2x32xf32>
    %60 = math.tanh %59 : vector<2x32xf32>
    %61 = vector.extract_strided_slice %47 {offsets = [6, 0], sizes = [2, 32], strides = [1, 1]} : vector<16x32xf32> to vector<2x32xf32>
    %cst_29 = arith.constant dense<0.000000e+00> : vector<2x32xf32>
    %62 = tpu.matmul %60, %43, %cst_29 {dimension_numbers = #tpu.dot_dimension_numbers<[1], [0], [0], [1], [0, 0, 1, 1], [], []>} : vector<2x32xf32>, vector<32x32xf32>, vector<2x32xf32> -> vector<2x32xf32>
    %63 = arith.addf %61, %62 : vector<2x32xf32>
    %64 = math.tanh %63 : vector<2x32xf32>
    %65 = vector.extract_strided_slice %47 {offsets = [8, 0], sizes = [2, 32], strides = [1, 1]} : vector<16x32xf32> to vector<2x32xf32>
    %cst_30 = arith.constant dense<0.000000e+00> : vector<2x32xf32>
    %66 = tpu.matmul %64, %43, %cst_30 {dimension_numbers = #tpu.dot_dimension_numbers<[1], [0], [0], [1], [0, 0, 1, 1], [], []>} : vector<2x32xf32>, vector<32x32xf32>, vector<2x32xf32> -> vector<2x32xf32>
    %67 = arith.addf %65, %66 : vector<2x32xf32>
    %68 = math.tanh %67 : vector<2x32xf32>
    %69 = vector.extract_strided_slice %47 {offsets = [10, 0], sizes = [2, 32], strides = [1, 1]} : vector<16x32xf32> to vector<2x32xf32>
    %cst_31 = arith.constant dense<0.000000e+00> : vector<2x32xf32>
    %70 = tpu.matmul %68, %43, %cst_31 {dimension_numbers = #tpu.dot_dimension_numbers<[1], [0], [0], [1], [0, 0, 1, 1], [], []>} : vector<2x32xf32>, vector<32x32xf32>, vector<2x32xf32> -> vector<2x32xf32>
    %71 = arith.addf %69, %70 : vector<2x32xf32>
    %72 = math.tanh %71 : vector<2x32xf32>
    %73 = vector.extract_strided_slice %47 {offsets = [12, 0], sizes = [2, 32], strides = [1, 1]} : vector<16x32xf32> to vector<2x32xf32>
    %cst_32 = arith.constant dense<0.000000e+00> : vector<2x32xf32>
    %74 = tpu.matmul %72, %43, %cst_32 {dimension_numbers = #tpu.dot_dimension_numbers<[1], [0], [0], [1], [0, 0, 1, 1], [], []>} : vector<2x32xf32>, vector<32x32xf32>, vector<2x32xf32> -> vector<2x32xf32>
    %75 = arith.addf %73, %74 : vector<2x32xf32>
    %76 = math.tanh %75 : vector<2x32xf32>
    %77 = vector.extract_strided_slice %47 {offsets = [14, 0], sizes = [2, 32], strides = [1, 1]} : vector<16x32xf32> to vector<2x32xf32>
    %cst_33 = arith.constant dense<0.000000e+00> : vector<2x32xf32>
    %78 = tpu.matmul %76, %43, %cst_33 {dimension_numbers = #tpu.dot_dimension_numbers<[1], [0], [0], [1], [0, 0, 1, 1], [], []>} : vector<2x32xf32>, vector<32x32xf32>, vector<2x32xf32> -> vector<2x32xf32>
    %79 = arith.addf %77, %78 : vector<2x32xf32>
    %80 = math.tanh %79 : vector<2x32xf32>
    %81 = tpu.concatenate %52, %56, %60, %64, %68, %72, %76, %80 in 0 : vector<2x32xf32>, vector<2x32xf32>, vector<2x32xf32>, vector<2x32xf32>, vector<2x32xf32>, vector<2x32xf32>, vector<2x32xf32>, vector<2x32xf32> -> vector<16x32xf32>
    %c2 = arith.constant 2 : index
    %c0_34 = arith.constant 0 : index
    %82 = vector.load %arg8[%c2, %c0_34] : memref<4x32xf32, #tpu.memory_space<vmem>>, vector<2x32xf32>
    tpu.vector_store %arg8[%c2, %c0_34], %80 {strides = array<i32>} : memref<4x32xf32, #tpu.memory_space<vmem>>, vector<2x32xf32>,
    %c0_35 = arith.constant 0 : index
    %c0_36 = arith.constant 0 : index
    %83 = vector.load %arg7[%c0_35, %c0_36] : memref<16x32xf32, #tpu.memory_space<vmem>>, vector<16x32xf32>
    tpu.vector_store %arg7[%c0_35, %c0_36], %81 {strides = array<i32>} : memref<16x32xf32, #tpu.memory_space<vmem>>, vector<16x32xf32>,
    return
  }
}

</mosaic_0001>

<llo_original>
// kernel: tpu_custom_call.1
$region0: #{tpu_custom_call.1}
  #allocation0 [shape = 'u32[]', space=smem, size = 0x4, offset = 0x4, fixed_abs, tag = 'smem constant byte address 0x4 - core index']
  #allocation1 [shape = 'u32[144,128]{1,0:T(1,128)}', space=vmem, size = 0x12000, scoped, tag = 'internal scratch']
  %s0 = inlined_call_operand.vmem [shape: f32[16,8], index: 0, kind: input, shape index: {}]
  %s1 = inlined_call_operand.vmem [shape: f32[8,32], index: 1, kind: input, shape index: {}]
  %s2 = inlined_call_operand.hbm [shape: f32[32,32], index: 2, kind: input, shape index: {}]
  %s3 = inlined_call_operand.hbm [shape: f32[32,32], index: 3, kind: input, shape index: {}]
  %s4 = inlined_call_operand.hbm [shape: f32[32,32], index: 4, kind: input, shape index: {}]
  %s5 = inlined_call_operand.vmem [shape: f32[1,32], index: 5, kind: input, shape index: {}]
  %s6 = inlined_call_operand.vmem [shape: f32[1,32], index: 6, kind: input, shape index: {}]
  %s7 = inlined_call_operand.hbm [shape: f32[16,32], index: 7, kind: output, shape index: {0}]
  %s8 = inlined_call_operand.hbm [shape: f32[4,32], index: 8, kind: output, shape index: {1}]
  %9 = xla_tuple %s7, %s8
  %s10 = sld [smem:[#allocation0]]
  $region58: #{tpu_custom_call.1} parent=0
    _
  %s12 = ssub.s32 1, %s10
  %s13 = scalar_select 0, %s12, %s10
  $region1: #{tpu_custom_call.1} parent=0
    #allocation2 [shape = 'u8[16384]{0}', space=vmem, size = 0x4000, scoped, tag = 'input window, operand 2, single buffered']
    #allocation3 [shape = 's32[1]{0}', space=sflag, size = 0x4, scoped, tag = 'scoped memory for tpu_custom_call.1']
    #allocation4 [shape = 's32[1]{0}', space=sflag, size = 0x4, scoped, tag = 'scoped memory for tpu_custom_call.1']
    #allocation5 [shape = 'u8[16384]{0}', space=vmem, size = 0x4000, scoped, tag = 'input window, operand 3, single buffered']
    #allocation6 [shape = 's32[1]{0}', space=sflag, size = 0x4, scoped, tag = 'scoped memory for tpu_custom_call.1']
    #allocation7 [shape = 'u8[16384]{0}', space=vmem, size = 0x4000, scoped, tag = 'input window, operand 4, single buffered']
    #allocation8 [shape = 'u8[8192]{0}', space=vmem, size = 0x2000, scoped, tag = 'output window, operand 0, single buffered']
    #allocation9 [shape = 'u8[2048]{0}', space=vmem, size = 0x800, scoped, tag = 'output window, operand 1, single buffered']
    #allocation10 [shape = 's32[1]{0}', space=sflag, size = 0x4, scoped, tag = 'scoped memory for tpu_custom_call.1']
    %14 = vsyncpa [#allocation3], 0
    %15 = vsyncpa [#allocation6], 0
    %16 = vsyncpa [#allocation4], 0
    %17 = vsyncpa [#allocation10], 0
    // Predicated region
    $region2: #{tpu_custom_call.1} parent=1 // pred_check
      _
    $region3: #{tpu_custom_call.1} parent=1 // pred_check_branch
      %19 = sbr.rel (0) target = $region5
    $region4: #{tpu_custom_call.1} parent=1 // pred_region
      _
    $region5: #{tpu_custom_call.1} parent=1 // pred_fallthru
      _
    // Predicated region
    $region6: #{tpu_custom_call.1} parent=1 // pred_check
      _
    $region7: #{tpu_custom_call.1} parent=1 // pred_check_branch
      %21 = sbr.rel (0) target = $region9
    $region8: #{tpu_custom_call.1} parent=1 // pred_region
      _
    $region9: #{tpu_custom_call.1} parent=1 // pred_fallthru
      _
    // Predicated region
    $region10: #{tpu_custom_call.1} parent=1 // pred_check
      _
    $region11: #{tpu_custom_call.1} parent=1 // pred_check_branch
      %23 = sbr.rel (0) target = $region13
    $region12: #{tpu_custom_call.1} parent=1 // pred_region
      %s25 = ssub.s32 512, 512
      %26 = vsyncadd [#allocation3], %s25
      %s27 = sshll.u32 [#allocation2], 4
      %s28 = int_to_ptr.vmem [resolvable:$true] %s27
      %33 = dma.hbm_to_vmem [thread:$0]  %s2, 512, %s28, [#allocation3], 128, 128, 8
    $region13: #{tpu_custom_call.1} parent=1 // pred_fallthru
      _
    // Predicated region
    $region14: #{tpu_custom_call.1} parent=1 // pred_check
      _
    $region15: #{tpu_custom_call.1} parent=1 // pred_check_branch
      %35 = sbr.rel (0) target = $region17
    $region16: #{tpu_custom_call.1} parent=1 // pred_region
      %s37 = ssub.s32 512, 512
      %38 = vsyncadd [#allocation6], %s37
      %s39 = sshll.u32 [#allocation5], 4
      %s40 = int_to_ptr.vmem [resolvable:$true] %s39
      %45 = dma.hbm_to_vmem [thread:$0]  %s3, 512, %s40, [#allocation6], 128, 128, 8
    $region17: #{tpu_custom_call.1} parent=1 // pred_fallthru
      _
    // Predicated region
    $region18: #{tpu_custom_call.1} parent=1 // pred_check
      _
    $region19: #{tpu_custom_call.1} parent=1 // pred_check_branch
      %47 = sbr.rel (0) target = $region21
    $region20: #{tpu_custom_call.1} parent=1 // pred_region
      %s49 = ssub.s32 512, 512
      %50 = vsyncadd [#allocation6], %s49
      %s51 = sshll.u32 [#allocation7], 4
      %s52 = int_to_ptr.vmem [resolvable:$true] %s51
      %57 = dma.hbm_to_vmem [thread:$0]  %s4, 512, %s52, [#allocation6], 128, 128, 8
    $region21: #{tpu_custom_call.1} parent=1 // pred_fallthru
      _
    // Predicated region
    $region22: #{tpu_custom_call.1} parent=1 // pred_check
      _
    $region23: #{tpu_custom_call.1} parent=1 // pred_check_branch
      %59 = sbr.rel (0) target = $region25
    $region24: #{tpu_custom_call.1} parent=1 // pred_region
      _
    $region25: #{tpu_custom_call.1} parent=1 // pred_fallthru
      _
    // Predicated region
    $region26: #{tpu_custom_call.1} parent=1 // pred_check
      _
    $region27: #{tpu_custom_call.1} parent=1 // pred_check_branch
      %61 = sbr.rel (0) target = $region29
    $region28: #{tpu_custom_call.1} parent=1 // pred_region
      _
    $region29: #{tpu_custom_call.1} parent=1 // pred_fallthru
      _
    // Predicated region
    $region30: #{tpu_custom_call.1} parent=1 // pred_check
      _
    $region31: #{tpu_custom_call.1} parent=1 // pred_check_branch
      %63 = sbr.rel (0) target = $region33
    $region32: #{tpu_custom_call.1} parent=1 // pred_region
      %64 = dma.done [#allocation3], 512
    $region33: #{tpu_custom_call.1} parent=1 // pred_fallthru
      _
    // Predicated region
    $region34: #{tpu_custom_call.1} parent=1 // pred_check
      _
    $region35: #{tpu_custom_call.1} parent=1 // pred_check_branch
      %66 = sbr.rel (0) target = $region37
    $region36: #{tpu_custom_call.1} parent=1 // pred_region
      %67 = dma.done [#allocation6], 512
    $region37: #{tpu_custom_call.1} parent=1 // pred_fallthru
      _
    // Predicated region
    $region38: #{tpu_custom_call.1} parent=1 // pred_check
      _
    $region39: #{tpu_custom_call.1} parent=1 // pred_check_branch
      %69 = sbr.rel (0) target = $region41
    $region40: #{tpu_custom_call.1} parent=1 // pred_region
      %70 = dma.done [#allocation6], 512
    $region41: #{tpu_custom_call.1} parent=1 // pred_fallthru
      _
    %v71 = vld [vmem:[%s0] sm:$0xff]
    %v72 = vld [vmem:[%s0 + $0x8] sm:$0xff]
    %v73 = vld [vmem:[%s1] sm:$0xff]
    %v74 = vld [vmem:[#allocation5] sm:$0xff]
    %v75 = vld [vmem:[#allocation5 + $0x8] sm:$0xff]
    %v76 = vld [vmem:[#allocation5 + $0x10] sm:$0xff]
    %v77 = vld [vmem:[#allocation5 + $0x18] sm:$0xff]
    %v78 = vld [vmem:[%s5] sm:$0x1]
    %v80 = vlaneseq
    %v81 = vshrl.u32 %v80, 7
    %v82 = vsub.s32 0, %v81
    %v83 = vrot.slane %v78, %v82
    %vm85 = vcmask 64512
    %v87 = vsel %vm85, %v71, 0
    %v90 = vsel %vm85, %v72, 0
    %92 = vmatprep.subr.mxu0 0.0
    %93 = vmatpush1.msra.mxu0 0.0
    %94 = vmatprep.subr.mxu0 0.0
    %95 = vmatpush1.msra.mxu0 0.0
    %96 = vmatprep.subr.mxu0 0.0
    %97 = vmatpush1.msra.mxu0 0.0
    %98 = vmatprep.subr.mxu0 0.0
    %99 = vmatpush1.msra.mxu0 0.0
    %100 = vmatprep.subr.mxu0 0.0
    %101 = vmatpush1.msra.mxu0 0.0
    %102 = vmatprep.subr.mxu0 0.0
    %103 = vmatpush1.msra.mxu0 0.0
    %104 = vmatprep.subr.mxu0 0.0
    %105 = vmatpush1.msra.mxu0 0.0
    %106 = vmatprep.subr.mxu0 0.0
    %107 = vmatpush1.msra.mxu0 0.0
    %108 = vmatprep.subr.mxu0 0.0
    %109 = vmatpush1.msra.mxu0 0.0
    %110 = vmatprep.subr.mxu0 0.0
    %111 = vmatpush1.msra.mxu0 0.0
    %112 = vmatprep.subr.mxu0 0.0
    %113 = vmatpush1.msra.mxu0 0.0
    %114 = vmatprep.subr.mxu0 0.0
    %115 = vmatpush1.msra.mxu0 0.0
    %116 = vmatprep.subr.mxu0 0.0
    %117 = vmatpush1.msra.mxu0 0.0
    %118 = vmatprep.subr.mxu0 0.0
    %119 = vmatpush1.msra.mxu0 0.0
    %120 = vmatprep.subr.mxu0 0.0
    %121 = vmatpush1.msra.mxu0 0.0
    %122 = vmatprep.subr.mxu0 0.0
    %123 = vmatpush1.msra.mxu0 %v73
    %124 = vmatprep.subr.mxu0 0.0
    %125 = vmatpush2.msra.mxu0 0.0
    %126 = vmatprep.subr.mxu0 0.0
    %127 = vmatpush2.msra.mxu0 0.0
    %128 = vmatprep.subr.mxu0 0.0
    %129 = vmatpush2.msra.mxu0 0.0
    %130 = vmatprep.subr.mxu0 0.0
    %131 = vmatpush2.msra.mxu0 0.0
    %132 = vmatprep.subr.mxu0 0.0
    %133 = vmatpush2.msra.mxu0 0.0
    %134 = vmatprep.subr.mxu0 0.0
    %135 = vmatpush2.msra.mxu0 0.0
    %136 = vmatprep.subr.mxu0 0.0
    %137 = vmatpush2.msra.mxu0 0.0
    %138 = vmatprep.subr.mxu0 0.0
    %139 = vmatpush2.msra.mxu0 0.0
    %140 = vmatprep.subr.mxu0 0.0
    %141 = vmatpush2.msra.mxu0 0.0
    %142 = vmatprep.subr.mxu0 0.0
    %143 = vmatpush2.msra.mxu0 0.0
    %144 = vmatprep.subr.mxu0 0.0
    %145 = vmatpush2.msra.mxu0 0.0
    %146 = vmatprep.subr.mxu0 0.0
    %147 = vmatpush2.msra.mxu0 0.0
    %148 = vmatprep.subr.mxu0 0.0
    %149 = vmatpush2.msra.mxu0 0.0
    %150 = vmatprep.subr.mxu0 0.0
    %151 = vmatpush2.msra.mxu0 0.0
    %152 = vmatprep.subr.mxu0 0.0
    %153 = vmatpush2.msra.mxu0 0.0
    %154 = vmatprep.subr.mxu0 0.0
    %155 = vmatpush2.msra.mxu0 0.0
    %156 = vmatprep.mubr.f32.mxu0 0.0
    %157 = vmatmul.mubr.f32.gmra.mxu0 %v87
    %v158 = vpop.f32.mrf.mxu0
    %v159 = vadd.f32 %v83, %v158
    %v160 = vpop.f32.mrf.mxu0
    %161 = vmatprep.mubr.f32.mxu0 0.0
    %162 = vmatmul.mubr.f32.gmra.mxu0 %v90
    %v163 = vpop.f32.mrf.mxu0
    %v164 = vadd.f32 %v83, %v163
    %v165 = vpop.f32.mrf.mxu0
    %166 = vdwg.mxu0
    %vm167 = vcmask 261120
    %v169 = vsel %vm167, 0.0, 0
    %171 = vmatprep.subr.mxu0 0.0
    %172 = vmatpush1.msra.mxu0 0.0
    %173 = vmatprep.subr.mxu0 0.0
    %174 = vmatpush1.msra.mxu0 0.0
    %175 = vmatprep.subr.mxu0 0.0
    %176 = vmatpush1.msra.mxu0 0.0
    %177 = vmatprep.subr.mxu0 0.0
    %178 = vmatpush1.msra.mxu0 0.0
    %179 = vmatprep.subr.mxu0 0.0
    %180 = vmatpush1.msra.mxu0 0.0
    %181 = vmatprep.subr.mxu0 0.0
    %182 = vmatpush1.msra.mxu0 0.0
    %183 = vmatprep.subr.mxu0 0.0
    %184 = vmatpush1.msra.mxu0 0.0
    %185 = vmatprep.subr.mxu0 0.0
    %186 = vmatpush1.msra.mxu0 0.0
    %187 = vmatprep.subr.mxu0 0.0
    %188 = vmatpush1.msra.mxu0 0.0
    %189 = vmatprep.subr.mxu0 0.0
    %190 = vmatpush1.msra.mxu0 0.0
    %191 = vmatprep.subr.mxu0 0.0
    %192 = vmatpush1.msra.mxu0 0.0
    %193 = vmatprep.subr.mxu0 0.0
    %194 = vmatpush1.msra.mxu0 0.0
    %195 = vmatprep.subr.mxu0 0.0
    %196 = vmatpush1.msra.mxu0 %v77
    %197 = vmatprep.subr.mxu0 0.0
    %198 = vmatpush1.msra.mxu0 %v76
    %199 = vmatprep.subr.mxu0 0.0
    %200 = vmatpush1.msra.mxu0 %v75
    %201 = vmatprep.subr.mxu0 0.0
    %202 = vmatpush1.msra.mxu0 %v74
    %203 = vmatprep.subr.mxu0 0.0
    %204 = vmatpush2.msra.mxu0 0.0
    %205 = vmatprep.subr.mxu0 0.0
    %206 = vmatpush2.msra.mxu0 0.0
    %207 = vmatprep.subr.mxu0 0.0
    %208 = vmatpush2.msra.mxu0 0.0
    %209 = vmatprep.subr.mxu0 0.0
    %210 = vmatpush2.msra.mxu0 0.0
    %211 = vmatprep.subr.mxu0 0.0
    %212 = vmatpush2.msra.mxu0 0.0
    %213 = vmatprep.subr.mxu0 0.0
    %214 = vmatpush2.msra.mxu0 0.0
    %215 = vmatprep.subr.mxu0 0.0
    %216 = vmatpush2.msra.mxu0 0.0
    %217 = vmatprep.subr.mxu0 0.0
    %218 = vmatpush2.msra.mxu0 0.0
    %219 = vmatprep.subr.mxu0 0.0
    %220 = vmatpush2.msra.mxu0 0.0
    %221 = vmatprep.subr.mxu0 0.0
    %222 = vmatpush2.msra.mxu0 0.0
    %223 = vmatprep.subr.mxu0 0.0
    %224 = vmatpush2.msra.mxu0 0.0
    %225 = vmatprep.subr.mxu0 0.0
    %226 = vmatpush2.msra.mxu0 0.0
    %227 = vmatprep.subr.mxu0 0.0
    %228 = vmatpush2.msra.mxu0 0.0
    %229 = vmatprep.subr.mxu0 0.0
    %230 = vmatpush2.msra.mxu0 0.0
    %231 = vmatprep.subr.mxu0 0.0
    %232 = vmatpush2.msra.mxu0 0.0
    %233 = vmatprep.subr.mxu0 0.0
    %234 = vmatpush2.msra.mxu0 0.0
    %235 = vmatprep.mubr.f32.mxu0 0.0
    %236 = vmatmul.mubr.f32.gmra.mxu0 %v169
    %v237 = vpop.f32.mrf.mxu0
    %v238 = vadd.f32 0.0, %v237
    %v239 = vpop.f32.mrf.mxu0
    %240 = vdwg.mxu0
    %v241 = vadd.f32 %v159, %v238
    %v242 = vtanh.pop %v241
    %v244 = vsel %vm167, %v242, 0
    %246 = vmatprep.subr.mxu0 0.0
    %247 = vmatpush1.msra.mxu0 0.0
    %248 = vmatprep.subr.mxu0 0.0
    %249 = vmatpush1.msra.mxu0 0.0
    %250 = vmatprep.subr.mxu0 0.0
    %251 = vmatpush1.msra.mxu0 0.0
    %252 = vmatprep.subr.mxu0 0.0
    %253 = vmatpush1.msra.mxu0 0.0
    %254 = vmatprep.subr.mxu0 0.0
    %255 = vmatpush1.msra.mxu0 0.0
    %256 = vmatprep.subr.mxu0 0.0
    %257 = vmatpush1.msra.mxu0 0.0
    %258 = vmatprep.subr.mxu0 0.0
    %259 = vmatpush1.msra.mxu0 0.0
    %260 = vmatprep.subr.mxu0 0.0
    %261 = vmatpush1.msra.mxu0 0.0
    %262 = vmatprep.subr.mxu0 0.0
    %263 = vmatpush1.msra.mxu0 0.0
    %264 = vmatprep.subr.mxu0 0.0
    %265 = vmatpush1.msra.mxu0 0.0
    %266 = vmatprep.subr.mxu0 0.0
    %267 = vmatpush1.msra.mxu0 0.0
    %268 = vmatprep.subr.mxu0 0.0
    %269 = vmatpush1.msra.mxu0 0.0
    %270 = vmatprep.subr.mxu0 0.0
    %271 = vmatpush1.msra.mxu0 %v77
    %272 = vmatprep.subr.mxu0 0.0
    %273 = vmatpush1.msra.mxu0 %v76
    %274 = vmatprep.subr.mxu0 0.0
    %275 = vmatpush1.msra.mxu0 %v75
    %276 = vmatprep.subr.mxu0 0.0
    %277 = vmatpush1.msra.mxu0 %v74
    %278 = vmatprep.subr.mxu0 0.0
    %279 = vmatpush2.msra.mxu0 0.0
    %280 = vmatprep.subr.mxu0 0.0
    %281 = vmatpush2.msra.mxu0 0.0
    %282 = vmatprep.subr.mxu0 0.0
    %283 = vmatpush2.msra.mxu0 0.0
    %284 = vmatprep.subr.mxu0 0.0
    %285 = vmatpush2.msra.mxu0 0.0
    %286 = vmatprep.subr.mxu0 0.0
    %287 = vmatpush2.msra.mxu0 0.0
    %288 = vmatprep.subr.mxu0 0.0
    %289 = vmatpush2.msra.mxu0 0.0
    %290 = vmatprep.subr.mxu0 0.0
    %291 = vmatpush2.msra.mxu0 0.0
    %292 = vmatprep.subr.mxu0 0.0
    %293 = vmatpush2.msra.mxu0 0.0
    %294 = vmatprep.subr.mxu0 0.0
    %295 = vmatpush2.msra.mxu0 0.0
    %296 = vmatprep.subr.mxu0 0.0
    %297 = vmatpush2.msra.mxu0 0.0
    %298 = vmatprep.subr.mxu0 0.0
    %299 = vmatpush2.msra.mxu0 0.0
    %300 = vmatprep.subr.mxu0 0.0
    %301 = vmatpush2.msra.mxu0 0.0
    %302 = vmatprep.subr.mxu0 0.0
    %303 = vmatpush2.msra.mxu0 0.0
    %304 = vmatprep.subr.mxu0 0.0
    %305 = vmatpush2.msra.mxu0 0.0
    %306 = vmatprep.subr.mxu0 0.0
    %307 = vmatpush2.msra.mxu0 0.0
    %308 = vmatprep.subr.mxu0 0.0
    %309 = vmatpush2.msra.mxu0 0.0
    %310 = vmatprep.mubr.f32.mxu0 0.0
    %311 = vmatmul.mubr.f32.gmra.mxu0 %v244
    %v312 = vpop.f32.mrf.mxu0
    %v313 = vadd.f32 0.0, %v312
    %v314 = vpop.f32.mrf.mxu0
    %315 = vdwg.mxu0
    %v317 = vrot.slane %v313, 6
    %v319 = vadd.f32 %v159, %v317
    %v320 = vtanh.pop %v319
    %v322 = vrot.slane %v320, 2
    %v323 = vsel %vm167, %v322, 0
    %325 = vmatprep.subr.mxu0 0.0
    %326 = vmatpush1.msra.mxu0 0.0
    %327 = vmatprep.subr.mxu0 0.0
    %328 = vmatpush1.msra.mxu0 0.0
    %329 = vmatprep.subr.mxu0 0.0
    %330 = vmatpush1.msra.mxu0 0.0
    %331 = vmatprep.subr.mxu0 0.0
    %332 = vmatpush1.msra.mxu0 0.0
    %333 = vmatprep.subr.mxu0 0.0
    %334 = vmatpush1.msra.mxu0 0.0
    %335 = vmatprep.subr.mxu0 0.0
    %336 = vmatpush1.msra.mxu0 0.0
    %337 = vmatprep.subr.mxu0 0.0
    %338 = vmatpush1.msra.mxu0 0.0
    %339 = vmatprep.subr.mxu0 0.0
    %340 = vmatpush1.msra.mxu0 0.0
    %341 = vmatprep.subr.mxu0 0.0
    %342 = vmatpush1.msra.mxu0 0.0
    %343 = vmatprep.subr.mxu0 0.0
    %344 = vmatpush1.msra.mxu0 0.0
    %345 = vmatprep.subr.mxu0 0.0
    %346 = vmatpush1.msra.mxu0 0.0
    %347 = vmatprep.subr.mxu0 0.0
    %348 = vmatpush1.msra.mxu0 0.0
    %349 = vmatprep.subr.mxu0 0.0
    %350 = vmatpush1.msra.mxu0 %v77
    %351 = vmatprep.subr.mxu0 0.0
    %352 = vmatpush1.msra.mxu0 %v76
    %353 = vmatprep.subr.mxu0 0.0
    %354 = vmatpush1.msra.mxu0 %v75
    %355 = vmatprep.subr.mxu0 0.0
    %356 = vmatpush1.msra.mxu0 %v74
    %357 = vmatprep.subr.mxu0 0.0
    %358 = vmatpush2.msra.mxu0 0.0
    %359 = vmatprep.subr.mxu0 0.0
    %360 = vmatpush2.msra.mxu0 0.0
    %361 = vmatprep.subr.mxu0 0.0
    %362 = vmatpush2.msra.mxu0 0.0
    %363 = vmatprep.subr.mxu0 0.0
    %364 = vmatpush2.msra.mxu0 0.0
    %365 = vmatprep.subr.mxu0 0.0
    %366 = vmatpush2.msra.mxu0 0.0
    %367 = vmatprep.subr.mxu0 0.0
    %368 = vmatpush2.msra.mxu0 0.0
    %369 = vmatprep.subr.mxu0 0.0
    %370 = vmatpush2.msra.mxu0 0.0
    %371 = vmatprep.subr.mxu0 0.0
    %372 = vmatpush2.msra.mxu0 0.0
    %373 = vmatprep.subr.mxu0 0.0
    %374 = vmatpush2.msra.mxu0 0.0
    %375 = vmatprep.subr.mxu0 0.0
    %376 = vmatpush2.msra.mxu0 0.0
    %377 = vmatprep.subr.mxu0 0.0
    %378 = vmatpush2.msra.mxu0 0.0
    %379 = vmatprep.subr.mxu0 0.0
    %380 = vmatpush2.msra.mxu0 0.0
    %381 = vmatprep.subr.mxu0 0.0
    %382 = vmatpush2.msra.mxu0 0.0
    %383 = vmatprep.subr.mxu0 0.0
    %384 = vmatpush2.msra.mxu0 0.0
    %385 = vmatprep.subr.mxu0 0.0
    %386 = vmatpush2.msra.mxu0 0.0
    %387 = vmatprep.subr.mxu0 0.0
    %388 = vmatpush2.msra.mxu0 0.0
    %389 = vmatprep.mubr.f32.mxu0 0.0
    %390 = vmatmul.mubr.f32.gmra.mxu0 %v323
    %v391 = vpop.f32.mrf.mxu0
    %v392 = vadd.f32 0.0, %v391
    %v393 = vpop.f32.mrf.mxu0
    %394 = vdwg.mxu0
    %v396 = vrot.slane %v392, 4
    %v398 = vadd.f32 %v159, %v396
    %v399 = vtanh.pop %v398
    %v401 = vrot.slane %v399, 4
    %v402 = vsel %vm167, %v401, 0
    %404 = vmatprep.subr.mxu0 0.0
    %405 = vmatpush1.msra.mxu0 0.0
    %406 = vmatprep.subr.mxu0 0.0
    %407 = vmatpush1.msra.mxu0 0.0
    %408 = vmatprep.subr.mxu0 0.0
    %409 = vmatpush1.msra.mxu0 0.0
    %410 = vmatprep.subr.mxu0 0.0
    %411 = vmatpush1.msra.mxu0 0.0
    %412 = vmatprep.subr.mxu0 0.0
    %413 = vmatpush1.msra.mxu0 0.0
    %414 = vmatprep.subr.mxu0 0.0
    %415 = vmatpush1.msra.mxu0 0.0
    %416 = vmatprep.subr.mxu0 0.0
    %417 = vmatpush1.msra.mxu0 0.0
    %418 = vmatprep.subr.mxu0 0.0
    %419 = vmatpush1.msra.mxu0 0.0
    %420 = vmatprep.subr.mxu0 0.0
    %421 = vmatpush1.msra.mxu0 0.0
    %422 = vmatprep.subr.mxu0 0.0
    %423 = vmatpush1.msra.mxu0 0.0
    %424 = vmatprep.subr.mxu0 0.0
    %425 = vmatpush1.msra.mxu0 0.0
    %426 = vmatprep.subr.mxu0 0.0
    %427 = vmatpush1.msra.mxu0 0.0
    %428 = vmatprep.subr.mxu0 0.0
    %429 = vmatpush1.msra.mxu0 %v77
    %430 = vmatprep.subr.mxu0 0.0
    %431 = vmatpush1.msra.mxu0 %v76
    %432 = vmatprep.subr.mxu0 0.0
    %433 = vmatpush1.msra.mxu0 %v75
    %434 = vmatprep.subr.mxu0 0.0
    %435 = vmatpush1.msra.mxu0 %v74
    %436 = vmatprep.subr.mxu0 0.0
    %437 = vmatpush2.msra.mxu0 0.0
    %438 = vmatprep.subr.mxu0 0.0
    %439 = vmatpush2.msra.mxu0 0.0
    %440 = vmatprep.subr.mxu0 0.0
    %441 = vmatpush2.msra.mxu0 0.0
    %442 = vmatprep.subr.mxu0 0.0
    %443 = vmatpush2.msra.mxu0 0.0
    %444 = vmatprep.subr.mxu0 0.0
    %445 = vmatpush2.msra.mxu0 0.0
    %446 = vmatprep.subr.mxu0 0.0
    %447 = vmatpush2.msra.mxu0 0.0
    %448 = vmatprep.subr.mxu0 0.0
    %449 = vmatpush2.msra.mxu0 0.0
    %450 = vmatprep.subr.mxu0 0.0
    %451 = vmatpush2.msra.mxu0 0.0
    %452 = vmatprep.subr.mxu0 0.0
    %453 = vmatpush2.msra.mxu0 0.0
    %454 = vmatprep.subr.mxu0 0.0
    %455 = vmatpush2.msra.mxu0 0.0
    %456 = vmatprep.subr.mxu0 0.0
    %457 = vmatpush2.msra.mxu0 0.0
    %458 = vmatprep.subr.mxu0 0.0
    %459 = vmatpush2.msra.mxu0 0.0
    %460 = vmatprep.subr.mxu0 0.0
    %461 = vmatpush2.msra.mxu0 0.0
    %462 = vmatprep.subr.mxu0 0.0
    %463 = vmatpush2.msra.mxu0 0.0
    %464 = vmatprep.subr.mxu0 0.0
    %465 = vmatpush2.msra.mxu0 0.0
    %466 = vmatprep.subr.mxu0 0.0
    %467 = vmatpush2.msra.mxu0 0.0
    %468 = vmatprep.mubr.f32.mxu0 0.0
    %469 = vmatmul.mubr.f32.gmra.mxu0 %v402
    %v470 = vpop.f32.mrf.mxu0
    %v471 = vadd.f32 0.0, %v470
    %v472 = vpop.f32.mrf.mxu0
    %473 = vdwg.mxu0
    %v475 = vrot.slane %v471, 2
    %v477 = vadd.f32 %v159, %v475
    %v478 = vtanh.pop %v477
    %v480 = vrot.slane %v478, 6
    %v481 = vsel %vm167, %v480, 0
    %483 = vmatprep.subr.mxu0 0.0
    %484 = vmatpush1.msra.mxu0 0.0
    %485 = vmatprep.subr.mxu0 0.0
    %486 = vmatpush1.msra.mxu0 0.0
    %487 = vmatprep.subr.mxu0 0.0
    %488 = vmatpush1.msra.mxu0 0.0
    %489 = vmatprep.subr.mxu0 0.0
    %490 = vmatpush1.msra.mxu0 0.0
    %491 = vmatprep.subr.mxu0 0.0
    %492 = vmatpush1.msra.mxu0 0.0
    %493 = vmatprep.subr.mxu0 0.0
    %494 = vmatpush1.msra.mxu0 0.0
    %495 = vmatprep.subr.mxu0 0.0
    %496 = vmatpush1.msra.mxu0 0.0
    %497 = vmatprep.subr.mxu0 0.0
    %498 = vmatpush1.msra.mxu0 0.0
    %499 = vmatprep.subr.mxu0 0.0
    %500 = vmatpush1.msra.mxu0 0.0
    %501 = vmatprep.subr.mxu0 0.0
    %502 = vmatpush1.msra.mxu0 0.0
    %503 = vmatprep.subr.mxu0 0.0
    %504 = vmatpush1.msra.mxu0 0.0
    %505 = vmatprep.subr.mxu0 0.0
    %506 = vmatpush1.msra.mxu0 0.0
    %507 = vmatprep.subr.mxu0 0.0
    %508 = vmatpush1.msra.mxu0 %v77
    %509 = vmatprep.subr.mxu0 0.0
    %510 = vmatpush1.msra.mxu0 %v76
    %511 = vmatprep.subr.mxu0 0.0
    %512 = vmatpush1.msra.mxu0 %v75
    %513 = vmatprep.subr.mxu0 0.0
    %514 = vmatpush1.msra.mxu0 %v74
    %515 = vmatprep.subr.mxu0 0.0
    %516 = vmatpush2.msra.mxu0 0.0
    %517 = vmatprep.subr.mxu0 0.0
    %518 = vmatpush2.msra.mxu0 0.0
    %519 = vmatprep.subr.mxu0 0.0
    %520 = vmatpush2.msra.mxu0 0.0
    %521 = vmatprep.subr.mxu0 0.0
    %522 = vmatpush2.msra.mxu0 0.0
    %523 = vmatprep.subr.mxu0 0.0
    %524 = vmatpush2.msra.mxu0 0.0
    %525 = vmatprep.subr.mxu0 0.0
    %526 = vmatpush2.msra.mxu0 0.0
    %527 = vmatprep.subr.mxu0 0.0
    %528 = vmatpush2.msra.mxu0 0.0
    %529 = vmatprep.subr.mxu0 0.0
    %530 = vmatpush2.msra.mxu0 0.0
    %531 = vmatprep.subr.mxu0 0.0
    %532 = vmatpush2.msra.mxu0 0.0
    %533 = vmatprep.subr.mxu0 0.0
    %534 = vmatpush2.msra.mxu0 0.0
    %535 = vmatprep.subr.mxu0 0.0
    %536 = vmatpush2.msra.mxu0 0.0
    %537 = vmatprep.subr.mxu0 0.0
    %538 = vmatpush2.msra.mxu0 0.0
    %539 = vmatprep.subr.mxu0 0.0
    %540 = vmatpush2.msra.mxu0 0.0
    %541 = vmatprep.subr.mxu0 0.0
    %542 = vmatpush2.msra.mxu0 0.0
    %543 = vmatprep.subr.mxu0 0.0
    %544 = vmatpush2.msra.mxu0 0.0
    %545 = vmatprep.subr.mxu0 0.0
    %546 = vmatpush2.msra.mxu0 0.0
    %547 = vmatprep.mubr.f32.mxu0 0.0
    %548 = vmatmul.mubr.f32.gmra.mxu0 %v481
    %v549 = vpop.f32.mrf.mxu0
    %v550 = vadd.f32 0.0, %v549
    %v551 = vpop.f32.mrf.mxu0
    %552 = vdwg.mxu0
    %v553 = vadd.f32 %v164, %v550
    %v554 = vtanh.pop %v553
    %v556 = vsel %vm167, %v554, 0
    %558 = vmatprep.subr.mxu0 0.0
    %559 = vmatpush1.msra.mxu0 0.0
    %560 = vmatprep.subr.mxu0 0.0
    %561 = vmatpush1.msra.mxu0 0.0
    %562 = vmatprep.subr.mxu0 0.0
    %563 = vmatpush1.msra.mxu0 0.0
    %564 = vmatprep.subr.mxu0 0.0
    %565 = vmatpush1.msra.mxu0 0.0
    %566 = vmatprep.subr.mxu0 0.0
    %567 = vmatpush1.msra.mxu0 0.0
    %568 = vmatprep.subr.mxu0 0.0
    %569 = vmatpush1.msra.mxu0 0.0
    %570 = vmatprep.subr.mxu0 0.0
    %571 = vmatpush1.msra.mxu0 0.0
    %572 = vmatprep.subr.mxu0 0.0
    %573 = vmatpush1.msra.mxu0 0.0
    %574 = vmatprep.subr.mxu0 0.0
    %575 = vmatpush1.msra.mxu0 0.0
    %576 = vmatprep.subr.mxu0 0.0
    %577 = vmatpush1.msra.mxu0 0.0
    %578 = vmatprep.subr.mxu0 0.0
    %579 = vmatpush1.msra.mxu0 0.0
    %580 = vmatprep.subr.mxu0 0.0
    %581 = vmatpush1.msra.mxu0 0.0
    %582 = vmatprep.subr.mxu0 0.0
    %583 = vmatpush1.msra.mxu0 %v77
    %584 = vmatprep.subr.mxu0 0.0
    %585 = vmatpush1.msra.mxu0 %v76
    %586 = vmatprep.subr.mxu0 0.0
    %587 = vmatpush1.msra.mxu0 %v75
    %588 = vmatprep.subr.mxu0 0.0
    %589 = vmatpush1.msra.mxu0 %v74
    %590 = vmatprep.subr.mxu0 0.0
    %591 = vmatpush2.msra.mxu0 0.0
    %592 = vmatprep.subr.mxu0 0.0
    %593 = vmatpush2.msra.mxu0 0.0
    %594 = vmatprep.subr.mxu0 0.0
    %595 = vmatpush2.msra.mxu0 0.0
    %596 = vmatprep.subr.mxu0 0.0
    %597 = vmatpush2.msra.mxu0 0.0
    %598 = vmatprep.subr.mxu0 0.0
    %599 = vmatpush2.msra.mxu0 0.0
    %600 = vmatprep.subr.mxu0 0.0
    %601 = vmatpush2.msra.mxu0 0.0
    %602 = vmatprep.subr.mxu0 0.0
    %603 = vmatpush2.msra.mxu0 0.0
    %604 = vmatprep.subr.mxu0 0.0
    %605 = vmatpush2.msra.mxu0 0.0
    %606 = vmatprep.subr.mxu0 0.0
    %607 = vmatpush2.msra.mxu0 0.0
    %608 = vmatprep.subr.mxu0 0.0
    %609 = vmatpush2.msra.mxu0 0.0
    %610 = vmatprep.subr.mxu0 0.0
    %611 = vmatpush2.msra.mxu0 0.0
    %612 = vmatprep.subr.mxu0 0.0
    %613 = vmatpush2.msra.mxu0 0.0
    %614 = vmatprep.subr.mxu0 0.0
    %615 = vmatpush2.msra.mxu0 0.0
    %616 = vmatprep.subr.mxu0 0.0
    %617 = vmatpush2.msra.mxu0 0.0
    %618 = vmatprep.subr.mxu0 0.0
    %619 = vmatpush2.msra.mxu0 0.0
    %620 = vmatprep.subr.mxu0 0.0
    %621 = vmatpush2.msra.mxu0 0.0
    %622 = vmatprep.mubr.f32.mxu0 0.0
    %623 = vmatmul.mubr.f32.gmra.mxu0 %v556
    %v624 = vpop.f32.mrf.mxu0
    %v625 = vadd.f32 0.0, %v624
    %v626 = vpop.f32.mrf.mxu0
    %627 = vdwg.mxu0
    %v629 = vrot.slane %v625, 6
    %v631 = vadd.f32 %v164, %v629
    %v632 = vtanh.pop %v631
    %v634 = vrot.slane %v632, 2
    %v635 = vsel %vm167, %v634, 0
    %637 = vmatprep.subr.mxu0 0.0
    %638 = vmatpush1.msra.mxu0 0.0
    %639 = vmatprep.subr.mxu0 0.0
    %640 = vmatpush1.msra.mxu0 0.0
    %641 = vmatprep.subr.mxu0 0.0
    %642 = vmatpush1.msra.mxu0 0.0
    %643 = vmatprep.subr.mxu0 0.0
    %644 = vmatpush1.msra.mxu0 0.0
    %645 = vmatprep.subr.mxu0 0.0
    %646 = vmatpush1.msra.mxu0 0.0
    %647 = vmatprep.subr.mxu0 0.0
    %648 = vmatpush1.msra.mxu0 0.0
    %649 = vmatprep.subr.mxu0 0.0
    %650 = vmatpush1.msra.mxu0 0.0
    %651 = vmatprep.subr.mxu0 0.0
    %652 = vmatpush1.msra.mxu0 0.0
    %653 = vmatprep.subr.mxu0 0.0
    %654 = vmatpush1.msra.mxu0 0.0
    %655 = vmatprep.subr.mxu0 0.0
    %656 = vmatpush1.msra.mxu0 0.0
    %657 = vmatprep.subr.mxu0 0.0
    %658 = vmatpush1.msra.mxu0 0.0
    %659 = vmatprep.subr.mxu0 0.0
    %660 = vmatpush1.msra.mxu0 0.0
    %661 = vmatprep.subr.mxu0 0.0
    %662 = vmatpush1.msra.mxu0 %v77
    %663 = vmatprep.subr.mxu0 0.0
    %664 = vmatpush1.msra.mxu0 %v76
    %665 = vmatprep.subr.mxu0 0.0
    %666 = vmatpush1.msra.mxu0 %v75
    %667 = vmatprep.subr.mxu0 0.0
    %668 = vmatpush1.msra.mxu0 %v74
    %669 = vmatprep.subr.mxu0 0.0
    %670 = vmatpush2.msra.mxu0 0.0
    %671 = vmatprep.subr.mxu0 0.0
    %672 = vmatpush2.msra.mxu0 0.0
    %673 = vmatprep.subr.mxu0 0.0
    %674 = vmatpush2.msra.mxu0 0.0
    %675 = vmatprep.subr.mxu0 0.0
    %676 = vmatpush2.msra.mxu0 0.0
    %677 = vmatprep.subr.mxu0 0.0
    %678 = vmatpush2.msra.mxu0 0.0
    %679 = vmatprep.subr.mxu0 0.0
    %680 = vmatpush2.msra.mxu0 0.0
    %681 = vmatprep.subr.mxu0 0.0
    %682 = vmatpush2.msra.mxu0 0.0
    %683 = vmatprep.subr.mxu0 0.0
    %684 = vmatpush2.msra.mxu0 0.0
    %685 = vmatprep.subr.mxu0 0.0
    %686 = vmatpush2.msra.mxu0 0.0
    %687 = vmatprep.subr.mxu0 0.0
    %688 = vmatpush2.msra.mxu0 0.0
    %689 = vmatprep.subr.mxu0 0.0
    %690 = vmatpush2.msra.mxu0 0.0
    %691 = vmatprep.subr.mxu0 0.0
    %692 = vmatpush2.msra.mxu0 0.0
    %693 = vmatprep.subr.mxu0 0.0
    %694 = vmatpush2.msra.mxu0 0.0
    %695 = vmatprep.subr.mxu0 0.0
    %696 = vmatpush2.msra.mxu0 0.0
    %697 = vmatprep.subr.mxu0 0.0
    %698 = vmatpush2.msra.mxu0 0.0
    %699 = vmatprep.subr.mxu0 0.0
    %700 = vmatpush2.msra.mxu0 0.0
    %701 = vmatprep.mubr.f32.mxu0 0.0
    %702 = vmatmul.mubr.f32.gmra.mxu0 %v635
    %v703 = vpop.f32.mrf.mxu0
    %v704 = vadd.f32 0.0, %v703
    %v705 = vpop.f32.mrf.mxu0
    %706 = vdwg.mxu0
    %v708 = vrot.slane %v704, 4
    %v710 = vadd.f32 %v164, %v708
    %v711 = vtanh.pop %v710
    %v713 = vrot.slane %v711, 4
    %v714 = vsel %vm167, %v713, 0
    %716 = vmatprep.subr.mxu0 0.0
    %717 = vmatpush1.msra.mxu0 0.0
    %718 = vmatprep.subr.mxu0 0.0
    %719 = vmatpush1.msra.mxu0 0.0
    %720 = vmatprep.subr.mxu0 0.0
    %721 = vmatpush1.msra.mxu0 0.0
    %722 = vmatprep.subr.mxu0 0.0
    %723 = vmatpush1.msra.mxu0 0.0
    %724 = vmatprep.subr.mxu0 0.0
    %725 = vmatpush1.msra.mxu0 0.0
    %726 = vmatprep.subr.mxu0 0.0
    %727 = vmatpush1.msra.mxu0 0.0
    %728 = vmatprep.subr.mxu0 0.0
    %729 = vmatpush1.msra.mxu0 0.0
    %730 = vmatprep.subr.mxu0 0.0
    %731 = vmatpush1.msra.mxu0 0.0
    %732 = vmatprep.subr.mxu0 0.0
    %733 = vmatpush1.msra.mxu0 0.0
    %734 = vmatprep.subr.mxu0 0.0
    %735 = vmatpush1.msra.mxu0 0.0
    %736 = vmatprep.subr.mxu0 0.0
    %737 = vmatpush1.msra.mxu0 0.0
    %738 = vmatprep.subr.mxu0 0.0
    %739 = vmatpush1.msra.mxu0 0.0
    %740 = vmatprep.subr.mxu0 0.0
    %741 = vmatpush1.msra.mxu0 %v77
    %742 = vmatprep.subr.mxu0 0.0
    %743 = vmatpush1.msra.mxu0 %v76
    %744 = vmatprep.subr.mxu0 0.0
    %745 = vmatpush1.msra.mxu0 %v75
    %746 = vmatprep.subr.mxu0 0.0
    %747 = vmatpush1.msra.mxu0 %v74
    %748 = vmatprep.subr.mxu0 0.0
    %749 = vmatpush2.msra.mxu0 0.0
    %750 = vmatprep.subr.mxu0 0.0
    %751 = vmatpush2.msra.mxu0 0.0
    %752 = vmatprep.subr.mxu0 0.0
    %753 = vmatpush2.msra.mxu0 0.0
    %754 = vmatprep.subr.mxu0 0.0
    %755 = vmatpush2.msra.mxu0 0.0
    %756 = vmatprep.subr.mxu0 0.0
    %757 = vmatpush2.msra.mxu0 0.0
    %758 = vmatprep.subr.mxu0 0.0
    %759 = vmatpush2.msra.mxu0 0.0
    %760 = vmatprep.subr.mxu0 0.0
    %761 = vmatpush2.msra.mxu0 0.0
    %762 = vmatprep.subr.mxu0 0.0
    %763 = vmatpush2.msra.mxu0 0.0
    %764 = vmatprep.subr.mxu0 0.0
    %765 = vmatpush2.msra.mxu0 0.0
    %766 = vmatprep.subr.mxu0 0.0
    %767 = vmatpush2.msra.mxu0 0.0
    %768 = vmatprep.subr.mxu0 0.0
    %769 = vmatpush2.msra.mxu0 0.0
    %770 = vmatprep.subr.mxu0 0.0
    %771 = vmatpush2.msra.mxu0 0.0
    %772 = vmatprep.subr.mxu0 0.0
    %773 = vmatpush2.msra.mxu0 0.0
    %774 = vmatprep.subr.mxu0 0.0
    %775 = vmatpush2.msra.mxu0 0.0
    %776 = vmatprep.subr.mxu0 0.0
    %777 = vmatpush2.msra.mxu0 0.0
    %778 = vmatprep.subr.mxu0 0.0
    %779 = vmatpush2.msra.mxu0 0.0
    %780 = vmatprep.mubr.f32.mxu0 0.0
    %781 = vmatmul.mubr.f32.gmra.mxu0 %v714
    %v782 = vpop.f32.mrf.mxu0
    %v783 = vadd.f32 0.0, %v782
    %v784 = vpop.f32.mrf.mxu0
    %785 = vdwg.mxu0
    %v787 = vrot.slane %v783, 2
    %v789 = vadd.f32 %v164, %v787
    %v790 = vtanh.pop %v789
    %vm791 = vcmask 1041408
    %v792 = vsel %vm791, %v242, %v320
    %vm793 = vcmask 1043456
    %v794 = vsel %vm793, %v792, %v399
    %vm795 = vcmask 1045504
    %v796 = vsel %vm795, %v794, %v478
    %v797 = vsel %vm791, %v554, %v632
    %v798 = vsel %vm793, %v797, %v711
    %v799 = vsel %vm795, %v798, %v790
    %vm800 = vcmask 261126
    %801 = vst.msk [vmem:[#allocation9 - $0x6] sm:$0xc0] %vm800, %v790
    %v802 = vld [vmem:[#allocation2] sm:$0xff]
    %v803 = vld [vmem:[#allocation2 + $0x8] sm:$0xff]
    %v804 = vld [vmem:[#allocation2 + $0x10] sm:$0xff]
    %v805 = vld [vmem:[#allocation2 + $0x18] sm:$0xff]
    %v806 = vld [vmem:[#allocation7] sm:$0xff]
    %v807 = vld [vmem:[#allocation7 + $0x8] sm:$0xff]
    %v808 = vld [vmem:[#allocation7 + $0x10] sm:$0xff]
    %v809 = vld [vmem:[#allocation7 + $0x18] sm:$0xff]
    %v810 = vld [vmem:[%s6] sm:$0x1]
    %v812 = vlaneseq
    %v813 = vshrl.u32 %v812, 7
    %v814 = vsub.s32 0, %v813
    %v815 = vrot.slane %v810, %v814
    %v818 = vsel %vm167, %v796, 0
    %v821 = vsel %vm167, %v799, 0
    %823 = vmatprep.subr.mxu0 0.0
    %824 = vmatpush1.msra.mxu0 0.0
    %825 = vmatprep.subr.mxu0 0.0
    %826 = vmatpush1.msra.mxu0 0.0
    %827 = vmatprep.subr.mxu0 0.0
    %828 = vmatpush1.msra.mxu0 0.0
    %829 = vmatprep.subr.mxu0 0.0
    %830 = vmatpush1.msra.mxu0 0.0
    %831 = vmatprep.subr.mxu0 0.0
    %832 = vmatpush1.msra.mxu0 0.0
    %833 = vmatprep.subr.mxu0 0.0
    %834 = vmatpush1.msra.mxu0 0.0
    %835 = vmatprep.subr.mxu0 0.0
    %836 = vmatpush1.msra.mxu0 0.0
    %837 = vmatprep.subr.mxu0 0.0
    %838 = vmatpush1.msra.mxu0 0.0
    %839 = vmatprep.subr.mxu0 0.0
    %840 = vmatpush1.msra.mxu0 0.0
    %841 = vmatprep.subr.mxu0 0.0
    %842 = vmatpush1.msra.mxu0 0.0
    %843 = vmatprep.subr.mxu0 0.0
    %844 = vmatpush1.msra.mxu0 0.0
    %845 = vmatprep.subr.mxu0 0.0
    %846 = vmatpush1.msra.mxu0 0.0
    %847 = vmatprep.subr.mxu0 0.0
    %848 = vmatpush1.msra.mxu0 %v805
    %849 = vmatprep.subr.mxu0 0.0
    %850 = vmatpush1.msra.mxu0 %v804
    %851 = vmatprep.subr.mxu0 0.0
    %852 = vmatpush1.msra.mxu0 %v803
    %853 = vmatprep.subr.mxu0 0.0
    %854 = vmatpush1.msra.mxu0 %v802
    %855 = vmatprep.subr.mxu0 0.0
    %856 = vmatpush2.msra.mxu0 0.0
    %857 = vmatprep.subr.mxu0 0.0
    %858 = vmatpush2.msra.mxu0 0.0
    %859 = vmatprep.subr.mxu0 0.0
    %860 = vmatpush2.msra.mxu0 0.0
    %861 = vmatprep.subr.mxu0 0.0
    %862 = vmatpush2.msra.mxu0 0.0
    %863 = vmatprep.subr.mxu0 0.0
    %864 = vmatpush2.msra.mxu0 0.0
    %865 = vmatprep.subr.mxu0 0.0
    %866 = vmatpush2.msra.mxu0 0.0
    %867 = vmatprep.subr.mxu0 0.0
    %868 = vmatpush2.msra.mxu0 0.0
    %869 = vmatprep.subr.mxu0 0.0
    %870 = vmatpush2.msra.mxu0 0.0
    %871 = vmatprep.subr.mxu0 0.0
    %872 = vmatpush2.msra.mxu0 0.0
    %873 = vmatprep.subr.mxu0 0.0
    %874 = vmatpush2.msra.mxu0 0.0
    %875 = vmatprep.subr.mxu0 0.0
    %876 = vmatpush2.msra.mxu0 0.0
    %877 = vmatprep.subr.mxu0 0.0
    %878 = vmatpush2.msra.mxu0 0.0
    %879 = vmatprep.subr.mxu0 0.0
    %880 = vmatpush2.msra.mxu0 0.0
    %881 = vmatprep.subr.mxu0 0.0
    %882 = vmatpush2.msra.mxu0 0.0
    %883 = vmatprep.subr.mxu0 0.0
    %884 = vmatpush2.msra.mxu0 0.0
    %885 = vmatprep.subr.mxu0 0.0
    %886 = vmatpush2.msra.mxu0 0.0
    %887 = vmatprep.mubr.f32.mxu0 0.0
    %888 = vmatmul.mubr.f32.gmra.mxu0 %v818
    %v889 = vpop.f32.mrf.mxu0
    %v890 = vadd.f32 %v815, %v889
    %v891 = vpop.f32.mrf.mxu0
    %892 = vmatprep.mubr.f32.mxu0 0.0
    %893 = vmatmul.mubr.f32.gmra.mxu0 %v821
    %v894 = vpop.f32.mrf.mxu0
    %v895 = vadd.f32 %v815, %v894
    %v896 = vpop.f32.mrf.mxu0
    %897 = vdwg.mxu0
    %898 = vmatprep.subr.mxu0 0.0
    %899 = vmatpush1.msra.mxu0 0.0
    %900 = vmatprep.subr.mxu0 0.0
    %901 = vmatpush1.msra.mxu0 0.0
    %902 = vmatprep.subr.mxu0 0.0
    %903 = vmatpush1.msra.mxu0 0.0
    %904 = vmatprep.subr.mxu0 0.0
    %905 = vmatpush1.msra.mxu0 0.0
    %906 = vmatprep.subr.mxu0 0.0
    %907 = vmatpush1.msra.mxu0 0.0
    %908 = vmatprep.subr.mxu0 0.0
    %909 = vmatpush1.msra.mxu0 0.0
    %910 = vmatprep.subr.mxu0 0.0
    %911 = vmatpush1.msra.mxu0 0.0
    %912 = vmatprep.subr.mxu0 0.0
    %913 = vmatpush1.msra.mxu0 0.0
    %914 = vmatprep.subr.mxu0 0.0
    %915 = vmatpush1.msra.mxu0 0.0
    %916 = vmatprep.subr.mxu0 0.0
    %917 = vmatpush1.msra.mxu0 0.0
    %918 = vmatprep.subr.mxu0 0.0
    %919 = vmatpush1.msra.mxu0 0.0
    %920 = vmatprep.subr.mxu0 0.0
    %921 = vmatpush1.msra.mxu0 0.0
    %922 = vmatprep.subr.mxu0 0.0
    %923 = vmatpush1.msra.mxu0 %v809
    %924 = vmatprep.subr.mxu0 0.0
    %925 = vmatpush1.msra.mxu0 %v808
    %926 = vmatprep.subr.mxu0 0.0
    %927 = vmatpush1.msra.mxu0 %v807
    %928 = vmatprep.subr.mxu0 0.0
    %929 = vmatpush1.msra.mxu0 %v806
    %930 = vmatprep.subr.mxu0 0.0
    %931 = vmatpush2.msra.mxu0 0.0
    %932 = vmatprep.subr.mxu0 0.0
    %933 = vmatpush2.msra.mxu0 0.0
    %934 = vmatprep.subr.mxu0 0.0
    %935 = vmatpush2.msra.mxu0 0.0
    %936 = vmatprep.subr.mxu0 0.0
    %937 = vmatpush2.msra.mxu0 0.0
    %938 = vmatprep.subr.mxu0 0.0
    %939 = vmatpush2.msra.mxu0 0.0
    %940 = vmatprep.subr.mxu0 0.0
    %941 = vmatpush2.msra.mxu0 0.0
    %942 = vmatprep.subr.mxu0 0.0
    %943 = vmatpush2.msra.mxu0 0.0
    %944 = vmatprep.subr.mxu0 0.0
    %945 = vmatpush2.msra.mxu0 0.0
    %946 = vmatprep.subr.mxu0 0.0
    %947 = vmatpush2.msra.mxu0 0.0
    %948 = vmatprep.subr.mxu0 0.0
    %949 = vmatpush2.msra.mxu0 0.0
    %950 = vmatprep.subr.mxu0 0.0
    %951 = vmatpush2.msra.mxu0 0.0
    %952 = vmatprep.subr.mxu0 0.0
    %953 = vmatpush2.msra.mxu0 0.0
    %954 = vmatprep.subr.mxu0 0.0
    %955 = vmatpush2.msra.mxu0 0.0
    %956 = vmatprep.subr.mxu0 0.0
    %957 = vmatpush2.msra.mxu0 0.0
    %958 = vmatprep.subr.mxu0 0.0
    %959 = vmatpush2.msra.mxu0 0.0
    %960 = vmatprep.subr.mxu0 0.0
    %961 = vmatpush2.msra.mxu0 0.0
    %962 = vmatprep.mubr.f32.mxu0 0.0
    %963 = vmatmul.mubr.f32.gmra.mxu0 %v169
    %v964 = vpop.f32.mrf.mxu0
    %v965 = vadd.f32 0.0, %v964
    %v966 = vpop.f32.mrf.mxu0
    %967 = vdwg.mxu0
    %v968 = vadd.f32 %v890, %v965
    %v969 = vtanh.pop %v968
    %v971 = vsel %vm167, %v969, 0
    %973 = vmatprep.subr.mxu0 0.0
    %974 = vmatpush1.msra.mxu0 0.0
    %975 = vmatprep.subr.mxu0 0.0
    %976 = vmatpush1.msra.mxu0 0.0
    %977 = vmatprep.subr.mxu0 0.0
    %978 = vmatpush1.msra.mxu0 0.0
    %979 = vmatprep.subr.mxu0 0.0
    %980 = vmatpush1.msra.mxu0 0.0
    %981 = vmatprep.subr.mxu0 0.0
    %982 = vmatpush1.msra.mxu0 0.0
    %983 = vmatprep.subr.mxu0 0.0
    %984 = vmatpush1.msra.mxu0 0.0
    %985 = vmatprep.subr.mxu0 0.0
    %986 = vmatpush1.msra.mxu0 0.0
    %987 = vmatprep.subr.mxu0 0.0
    %988 = vmatpush1.msra.mxu0 0.0
    %989 = vmatprep.subr.mxu0 0.0
    %990 = vmatpush1.msra.mxu0 0.0
    %991 = vmatprep.subr.mxu0 0.0
    %992 = vmatpush1.msra.mxu0 0.0
    %993 = vmatprep.subr.mxu0 0.0
    %994 = vmatpush1.msra.mxu0 0.0
    %995 = vmatprep.subr.mxu0 0.0
    %996 = vmatpush1.msra.mxu0 0.0
    %997 = vmatprep.subr.mxu0 0.0
    %998 = vmatpush1.msra.mxu0 %v809
    %999 = vmatprep.subr.mxu0 0.0
    %1000 = vmatpush1.msra.mxu0 %v808
    %1001 = vmatprep.subr.mxu0 0.0
    %1002 = vmatpush1.msra.mxu0 %v807
    %1003 = vmatprep.subr.mxu0 0.0
    %1004 = vmatpush1.msra.mxu0 %v806
    %1005 = vmatprep.subr.mxu0 0.0
    %1006 = vmatpush2.msra.mxu0 0.0
    %1007 = vmatprep.subr.mxu0 0.0
    %1008 = vmatpush2.msra.mxu0 0.0
    %1009 = vmatprep.subr.mxu0 0.0
    %1010 = vmatpush2.msra.mxu0 0.0
    %1011 = vmatprep.subr.mxu0 0.0
    %1012 = vmatpush2.msra.mxu0 0.0
    %1013 = vmatprep.subr.mxu0 0.0
    %1014 = vmatpush2.msra.mxu0 0.0
    %1015 = vmatprep.subr.mxu0 0.0
    %1016 = vmatpush2.msra.mxu0 0.0
    %1017 = vmatprep.subr.mxu0 0.0
    %1018 = vmatpush2.msra.mxu0 0.0
    %1019 = vmatprep.subr.mxu0 0.0
    %1020 = vmatpush2.msra.mxu0 0.0
    %1021 = vmatprep.subr.mxu0 0.0
    %1022 = vmatpush2.msra.mxu0 0.0
    %1023 = vmatprep.subr.mxu0 0.0
    %1024 = vmatpush2.msra.mxu0 0.0
    %1025 = vmatprep.subr.mxu0 0.0
    %1026 = vmatpush2.msra.mxu0 0.0
    %1027 = vmatprep.subr.mxu0 0.0
    %1028 = vmatpush2.msra.mxu0 0.0
    %1029 = vmatprep.subr.mxu0 0.0
    %1030 = vmatpush2.msra.mxu0 0.0
    %1031 = vmatprep.subr.mxu0 0.0
    %1032 = vmatpush2.msra.mxu0 0.0
    %1033 = vmatprep.subr.mxu0 0.0
    %1034 = vmatpush2.msra.mxu0 0.0
    %1035 = vmatprep.subr.mxu0 0.0
    %1036 = vmatpush2.msra.mxu0 0.0
    %1037 = vmatprep.mubr.f32.mxu0 0.0
    %1038 = vmatmul.mubr.f32.gmra.mxu0 %v971
    %v1039 = vpop.f32.mrf.mxu0
    %v1040 = vadd.f32 0.0, %v1039
    %v1041 = vpop.f32.mrf.mxu0
    %1042 = vdwg.mxu0
    %v1044 = vrot.slane %v1040, 6
    %v1046 = vadd.f32 %v890, %v1044
    %v1047 = vtanh.pop %v1046
    %v1049 = vrot.slane %v1047, 2
    %v1050 = vsel %vm167, %v1049, 0
    %1052 = vmatprep.subr.mxu0 0.0
    %1053 = vmatpush1.msra.mxu0 0.0
    %1054 = vmatprep.subr.mxu0 0.0
    %1055 = vmatpush1.msra.mxu0 0.0
    %1056 = vmatprep.subr.mxu0 0.0
    %1057 = vmatpush1.msra.mxu0 0.0
    %1058 = vmatprep.subr.mxu0 0.0
    %1059 = vmatpush1.msra.mxu0 0.0
    %1060 = vmatprep.subr.mxu0 0.0
    %1061 = vmatpush1.msra.mxu0 0.0
    %1062 = vmatprep.subr.mxu0 0.0
    %1063 = vmatpush1.msra.mxu0 0.0
    %1064 = vmatprep.subr.mxu0 0.0
    %1065 = vmatpush1.msra.mxu0 0.0
    %1066 = vmatprep.subr.mxu0 0.0
    %1067 = vmatpush1.msra.mxu0 0.0
    %1068 = vmatprep.subr.mxu0 0.0
    %1069 = vmatpush1.msra.mxu0 0.0
    %1070 = vmatprep.subr.mxu0 0.0
    %1071 = vmatpush1.msra.mxu0 0.0
    %1072 = vmatprep.subr.mxu0 0.0
    %1073 = vmatpush1.msra.mxu0 0.0
    %1074 = vmatprep.subr.mxu0 0.0
    %1075 = vmatpush1.msra.mxu0 0.0
    %1076 = vmatprep.subr.mxu0 0.0
    %1077 = vmatpush1.msra.mxu0 %v809
    %1078 = vmatprep.subr.mxu0 0.0
    %1079 = vmatpush1.msra.mxu0 %v808
    %1080 = vmatprep.subr.mxu0 0.0
    %1081 = vmatpush1.msra.mxu0 %v807
    %1082 = vmatprep.subr.mxu0 0.0
    %1083 = vmatpush1.msra.mxu0 %v806
    %1084 = vmatprep.subr.mxu0 0.0
    %1085 = vmatpush2.msra.mxu0 0.0
    %1086 = vmatprep.subr.mxu0 0.0
    %1087 = vmatpush2.msra.mxu0 0.0
    %1088 = vmatprep.subr.mxu0 0.0
    %1089 = vmatpush2.msra.mxu0 0.0
    %1090 = vmatprep.subr.mxu0 0.0
    %1091 = vmatpush2.msra.mxu0 0.0
    %1092 = vmatprep.subr.mxu0 0.0
    %1093 = vmatpush2.msra.mxu0 0.0
    %1094 = vmatprep.subr.mxu0 0.0
    %1095 = vmatpush2.msra.mxu0 0.0
    %1096 = vmatprep.subr.mxu0 0.0
    %1097 = vmatpush2.msra.mxu0 0.0
    %1098 = vmatprep.subr.mxu0 0.0
    %1099 = vmatpush2.msra.mxu0 0.0
    %1100 = vmatprep.subr.mxu0 0.0
    %1101 = vmatpush2.msra.mxu0 0.0
    %1102 = vmatprep.subr.mxu0 0.0
    %1103 = vmatpush2.msra.mxu0 0.0
    %1104 = vmatprep.subr.mxu0 0.0
    %1105 = vmatpush2.msra.mxu0 0.0
    %1106 = vmatprep.subr.mxu0 0.0
    %1107 = vmatpush2.msra.mxu0 0.0
    %1108 = vmatprep.subr.mxu0 0.0
    %1109 = vmatpush2.msra.mxu0 0.0
    %1110 = vmatprep.subr.mxu0 0.0
    %1111 = vmatpush2.msra.mxu0 0.0
    %1112 = vmatprep.subr.mxu0 0.0
    %1113 = vmatpush2.msra.mxu0 0.0
    %1114 = vmatprep.subr.mxu0 0.0
    %1115 = vmatpush2.msra.mxu0 0.0
    %1116 = vmatprep.mubr.f32.mxu0 0.0
    %1117 = vmatmul.mubr.f32.gmra.mxu0 %v1050
    %v1118 = vpop.f32.mrf.mxu0
    %v1119 = vadd.f32 0.0, %v1118
    %v1120 = vpop.f32.mrf.mxu0
    %1121 = vdwg.mxu0
    %v1123 = vrot.slane %v1119, 4
    %v1125 = vadd.f32 %v890, %v1123
    %v1126 = vtanh.pop %v1125
    %v1128 = vrot.slane %v1126, 4
    %v1129 = vsel %vm167, %v1128, 0
    %1131 = vmatprep.subr.mxu0 0.0
    %1132 = vmatpush1.msra.mxu0 0.0
    %1133 = vmatprep.subr.mxu0 0.0
    %1134 = vmatpush1.msra.mxu0 0.0
    %1135 = vmatprep.subr.mxu0 0.0
    %1136 = vmatpush1.msra.mxu0 0.0
    %1137 = vmatprep.subr.mxu0 0.0
    %1138 = vmatpush1.msra.mxu0 0.0
    %1139 = vmatprep.subr.mxu0 0.0
    %1140 = vmatpush1.msra.mxu0 0.0
    %1141 = vmatprep.subr.mxu0 0.0
    %1142 = vmatpush1.msra.mxu0 0.0
    %1143 = vmatprep.subr.mxu0 0.0
    %1144 = vmatpush1.msra.mxu0 0.0
    %1145 = vmatprep.subr.mxu0 0.0
    %1146 = vmatpush1.msra.mxu0 0.0
    %1147 = vmatprep.subr.mxu0 0.0
    %1148 = vmatpush1.msra.mxu0 0.0
    %1149 = vmatprep.subr.mxu0 0.0
    %1150 = vmatpush1.msra.mxu0 0.0
    %1151 = vmatprep.subr.mxu0 0.0
    %1152 = vmatpush1.msra.mxu0 0.0
    %1153 = vmatprep.subr.mxu0 0.0
    %1154 = vmatpush1.msra.mxu0 0.0
    %1155 = vmatprep.subr.mxu0 0.0
    %1156 = vmatpush1.msra.mxu0 %v809
    %1157 = vmatprep.subr.mxu0 0.0
    %1158 = vmatpush1.msra.mxu0 %v808
    %1159 = vmatprep.subr.mxu0 0.0
    %1160 = vmatpush1.msra.mxu0 %v807
    %1161 = vmatprep.subr.mxu0 0.0
    %1162 = vmatpush1.msra.mxu0 %v806
    %1163 = vmatprep.subr.mxu0 0.0
    %1164 = vmatpush2.msra.mxu0 0.0
    %1165 = vmatprep.subr.mxu0 0.0
    %1166 = vmatpush2.msra.mxu0 0.0
    %1167 = vmatprep.subr.mxu0 0.0
    %1168 = vmatpush2.msra.mxu0 0.0
    %1169 = vmatprep.subr.mxu0 0.0
    %1170 = vmatpush2.msra.mxu0 0.0
    %1171 = vmatprep.subr.mxu0 0.0
    %1172 = vmatpush2.msra.mxu0 0.0
    %1173 = vmatprep.subr.mxu0 0.0
    %1174 = vmatpush2.msra.mxu0 0.0
    %1175 = vmatprep.subr.mxu0 0.0
    %1176 = vmatpush2.msra.mxu0 0.0
    %1177 = vmatprep.subr.mxu0 0.0
    %1178 = vmatpush2.msra.mxu0 0.0
    %1179 = vmatprep.subr.mxu0 0.0
    %1180 = vmatpush2.msra.mxu0 0.0
    %1181 = vmatprep.subr.mxu0 0.0
    %1182 = vmatpush2.msra.mxu0 0.0
    %1183 = vmatprep.subr.mxu0 0.0
    %1184 = vmatpush2.msra.mxu0 0.0
    %1185 = vmatprep.subr.mxu0 0.0
    %1186 = vmatpush2.msra.mxu0 0.0
    %1187 = vmatprep.subr.mxu0 0.0
    %1188 = vmatpush2.msra.mxu0 0.0
    %1189 = vmatprep.subr.mxu0 0.0
    %1190 = vmatpush2.msra.mxu0 0.0
    %1191 = vmatprep.subr.mxu0 0.0
    %1192 = vmatpush2.msra.mxu0 0.0
    %1193 = vmatprep.subr.mxu0 0.0
    %1194 = vmatpush2.msra.mxu0 0.0
    %1195 = vmatprep.mubr.f32.mxu0 0.0
    %1196 = vmatmul.mubr.f32.gmra.mxu0 %v1129
    %v1197 = vpop.f32.mrf.mxu0
    %v1198 = vadd.f32 0.0, %v1197
    %v1199 = vpop.f32.mrf.mxu0
    %1200 = vdwg.mxu0
    %v1202 = vrot.slane %v1198, 2
    %v1204 = vadd.f32 %v890, %v1202
    %v1205 = vtanh.pop %v1204
    %v1207 = vrot.slane %v1205, 6
    %v1208 = vsel %vm167, %v1207, 0
    %1210 = vmatprep.subr.mxu0 0.0
    %1211 = vmatpush1.msra.mxu0 0.0
    %1212 = vmatprep.subr.mxu0 0.0
    %1213 = vmatpush1.msra.mxu0 0.0
    %1214 = vmatprep.subr.mxu0 0.0
    %1215 = vmatpush1.msra.mxu0 0.0
    %1216 = vmatprep.subr.mxu0 0.0
    %1217 = vmatpush1.msra.mxu0 0.0
    %1218 = vmatprep.subr.mxu0 0.0
    %1219 = vmatpush1.msra.mxu0 0.0
    %1220 = vmatprep.subr.mxu0 0.0
    %1221 = vmatpush1.msra.mxu0 0.0
    %1222 = vmatprep.subr.mxu0 0.0
    %1223 = vmatpush1.msra.mxu0 0.0
    %1224 = vmatprep.subr.mxu0 0.0
    %1225 = vmatpush1.msra.mxu0 0.0
    %1226 = vmatprep.subr.mxu0 0.0
    %1227 = vmatpush1.msra.mxu0 0.0
    %1228 = vmatprep.subr.mxu0 0.0
    %1229 = vmatpush1.msra.mxu0 0.0
    %1230 = vmatprep.subr.mxu0 0.0
    %1231 = vmatpush1.msra.mxu0 0.0
    %1232 = vmatprep.subr.mxu0 0.0
    %1233 = vmatpush1.msra.mxu0 0.0
    %1234 = vmatprep.subr.mxu0 0.0
    %1235 = vmatpush1.msra.mxu0 %v809
    %1236 = vmatprep.subr.mxu0 0.0
    %1237 = vmatpush1.msra.mxu0 %v808
    %1238 = vmatprep.subr.mxu0 0.0
    %1239 = vmatpush1.msra.mxu0 %v807
    %1240 = vmatprep.subr.mxu0 0.0
    %1241 = vmatpush1.msra.mxu0 %v806
    %1242 = vmatprep.subr.mxu0 0.0
    %1243 = vmatpush2.msra.mxu0 0.0
    %1244 = vmatprep.subr.mxu0 0.0
    %1245 = vmatpush2.msra.mxu0 0.0
    %1246 = vmatprep.subr.mxu0 0.0
    %1247 = vmatpush2.msra.mxu0 0.0
    %1248 = vmatprep.subr.mxu0 0.0
    %1249 = vmatpush2.msra.mxu0 0.0
    %1250 = vmatprep.subr.mxu0 0.0
    %1251 = vmatpush2.msra.mxu0 0.0
    %1252 = vmatprep.subr.mxu0 0.0
    %1253 = vmatpush2.msra.mxu0 0.0
    %1254 = vmatprep.subr.mxu0 0.0
    %1255 = vmatpush2.msra.mxu0 0.0
    %1256 = vmatprep.subr.mxu0 0.0
    %1257 = vmatpush2.msra.mxu0 0.0
    %1258 = vmatprep.subr.mxu0 0.0
    %1259 = vmatpush2.msra.mxu0 0.0
    %1260 = vmatprep.subr.mxu0 0.0
    %1261 = vmatpush2.msra.mxu0 0.0
    %1262 = vmatprep.subr.mxu0 0.0
    %1263 = vmatpush2.msra.mxu0 0.0
    %1264 = vmatprep.subr.mxu0 0.0
    %1265 = vmatpush2.msra.mxu0 0.0
    %1266 = vmatprep.subr.mxu0 0.0
    %1267 = vmatpush2.msra.mxu0 0.0
    %1268 = vmatprep.subr.mxu0 0.0
    %1269 = vmatpush2.msra.mxu0 0.0
    %1270 = vmatprep.subr.mxu0 0.0
    %1271 = vmatpush2.msra.mxu0 0.0
    %1272 = vmatprep.subr.mxu0 0.0
    %1273 = vmatpush2.msra.mxu0 0.0
    %1274 = vmatprep.mubr.f32.mxu0 0.0
    %1275 = vmatmul.mubr.f32.gmra.mxu0 %v1208
    %v1276 = vpop.f32.mrf.mxu0
    %v1277 = vadd.f32 0.0, %v1276
    %v1278 = vpop.f32.mrf.mxu0
    %1279 = vdwg.mxu0
    %v1280 = vadd.f32 %v895, %v1277
    %v1281 = vtanh.pop %v1280
    %v1283 = vsel %vm167, %v1281, 0
    %1285 = vmatprep.subr.mxu0 0.0
    %1286 = vmatpush1.msra.mxu0 0.0
    %1287 = vmatprep.subr.mxu0 0.0
    %1288 = vmatpush1.msra.mxu0 0.0
    %1289 = vmatprep.subr.mxu0 0.0
    %1290 = vmatpush1.msra.mxu0 0.0
    %1291 = vmatprep.subr.mxu0 0.0
    %1292 = vmatpush1.msra.mxu0 0.0
    %1293 = vmatprep.subr.mxu0 0.0
    %1294 = vmatpush1.msra.mxu0 0.0
    %1295 = vmatprep.subr.mxu0 0.0
    %1296 = vmatpush1.msra.mxu0 0.0
    %1297 = vmatprep.subr.mxu0 0.0
    %1298 = vmatpush1.msra.mxu0 0.0
    %1299 = vmatprep.subr.mxu0 0.0
    %1300 = vmatpush1.msra.mxu0 0.0
    %1301 = vmatprep.subr.mxu0 0.0
    %1302 = vmatpush1.msra.mxu0 0.0
    %1303 = vmatprep.subr.mxu0 0.0
    %1304 = vmatpush1.msra.mxu0 0.0
    %1305 = vmatprep.subr.mxu0 0.0
    %1306 = vmatpush1.msra.mxu0 0.0
    %1307 = vmatprep.subr.mxu0 0.0
    %1308 = vmatpush1.msra.mxu0 0.0
    %1309 = vmatprep.subr.mxu0 0.0
    %1310 = vmatpush1.msra.mxu0 %v809
    %1311 = vmatprep.subr.mxu0 0.0
    %1312 = vmatpush1.msra.mxu0 %v808
    %1313 = vmatprep.subr.mxu0 0.0
    %1314 = vmatpush1.msra.mxu0 %v807
    %1315 = vmatprep.subr.mxu0 0.0
    %1316 = vmatpush1.msra.mxu0 %v806
    %1317 = vmatprep.subr.mxu0 0.0
    %1318 = vmatpush2.msra.mxu0 0.0
    %1319 = vmatprep.subr.mxu0 0.0
    %1320 = vmatpush2.msra.mxu0 0.0
    %1321 = vmatprep.subr.mxu0 0.0
    %1322 = vmatpush2.msra.mxu0 0.0
    %1323 = vmatprep.subr.mxu0 0.0
    %1324 = vmatpush2.msra.mxu0 0.0
    %1325 = vmatprep.subr.mxu0 0.0
    %1326 = vmatpush2.msra.mxu0 0.0
    %1327 = vmatprep.subr.mxu0 0.0
    %1328 = vmatpush2.msra.mxu0 0.0
    %1329 = vmatprep.subr.mxu0 0.0
    %1330 = vmatpush2.msra.mxu0 0.0
    %1331 = vmatprep.subr.mxu0 0.0
    %1332 = vmatpush2.msra.mxu0 0.0
    %1333 = vmatprep.subr.mxu0 0.0
    %1334 = vmatpush2.msra.mxu0 0.0
    %1335 = vmatprep.subr.mxu0 0.0
    %1336 = vmatpush2.msra.mxu0 0.0
    %1337 = vmatprep.subr.mxu0 0.0
    %1338 = vmatpush2.msra.mxu0 0.0
    %1339 = vmatprep.subr.mxu0 0.0
    %1340 = vmatpush2.msra.mxu0 0.0
    %1341 = vmatprep.subr.mxu0 0.0
    %1342 = vmatpush2.msra.mxu0 0.0
    %1343 = vmatprep.subr.mxu0 0.0
    %1344 = vmatpush2.msra.mxu0 0.0
    %1345 = vmatprep.subr.mxu0 0.0
    %1346 = vmatpush2.msra.mxu0 0.0
    %1347 = vmatprep.subr.mxu0 0.0
    %1348 = vmatpush2.msra.mxu0 0.0
    %1349 = vmatprep.mubr.f32.mxu0 0.0
    %1350 = vmatmul.mubr.f32.gmra.mxu0 %v1283
    %v1351 = vpop.f32.mrf.mxu0
    %v1352 = vadd.f32 0.0, %v1351
    %v1353 = vpop.f32.mrf.mxu0
    %1354 = vdwg.mxu0
    %v1356 = vrot.slane %v1352, 6
    %v1358 = vadd.f32 %v895, %v1356
    %v1359 = vtanh.pop %v1358
    %v1361 = vrot.slane %v1359, 2
    %v1362 = vsel %vm167, %v1361, 0
    %1364 = vmatprep.subr.mxu0 0.0
    %1365 = vmatpush1.msra.mxu0 0.0
    %1366 = vmatprep.subr.mxu0 0.0
    %1367 = vmatpush1.msra.mxu0 0.0
    %1368 = vmatprep.subr.mxu0 0.0
    %1369 = vmatpush1.msra.mxu0 0.0
    %1370 = vmatprep.subr.mxu0 0.0
    %1371 = vmatpush1.msra.mxu0 0.0
    %1372 = vmatprep.subr.mxu0 0.0
    %1373 = vmatpush1.msra.mxu0 0.0
    %1374 = vmatprep.subr.mxu0 0.0
    %1375 = vmatpush1.msra.mxu0 0.0
    %1376 = vmatprep.subr.mxu0 0.0
    %1377 = vmatpush1.msra.mxu0 0.0
    %1378 = vmatprep.subr.mxu0 0.0
    %1379 = vmatpush1.msra.mxu0 0.0
    %1380 = vmatprep.subr.mxu0 0.0
    %1381 = vmatpush1.msra.mxu0 0.0
    %1382 = vmatprep.subr.mxu0 0.0
    %1383 = vmatpush1.msra.mxu0 0.0
    %1384 = vmatprep.subr.mxu0 0.0
    %1385 = vmatpush1.msra.mxu0 0.0
    %1386 = vmatprep.subr.mxu0 0.0
    %1387 = vmatpush1.msra.mxu0 0.0
    %1388 = vmatprep.subr.mxu0 0.0
    %1389 = vmatpush1.msra.mxu0 %v809
    %1390 = vmatprep.subr.mxu0 0.0
    %1391 = vmatpush1.msra.mxu0 %v808
    %1392 = vmatprep.subr.mxu0 0.0
    %1393 = vmatpush1.msra.mxu0 %v807
    %1394 = vmatprep.subr.mxu0 0.0
    %1395 = vmatpush1.msra.mxu0 %v806
    %1396 = vmatprep.subr.mxu0 0.0
    %1397 = vmatpush2.msra.mxu0 0.0
    %1398 = vmatprep.subr.mxu0 0.0
    %1399 = vmatpush2.msra.mxu0 0.0
    %1400 = vmatprep.subr.mxu0 0.0
    %1401 = vmatpush2.msra.mxu0 0.0
    %1402 = vmatprep.subr.mxu0 0.0
    %1403 = vmatpush2.msra.mxu0 0.0
    %1404 = vmatprep.subr.mxu0 0.0
    %1405 = vmatpush2.msra.mxu0 0.0
    %1406 = vmatprep.subr.mxu0 0.0
    %1407 = vmatpush2.msra.mxu0 0.0
    %1408 = vmatprep.subr.mxu0 0.0
    %1409 = vmatpush2.msra.mxu0 0.0
    %1410 = vmatprep.subr.mxu0 0.0
    %1411 = vmatpush2.msra.mxu0 0.0
    %1412 = vmatprep.subr.mxu0 0.0
    %1413 = vmatpush2.msra.mxu0 0.0
    %1414 = vmatprep.subr.mxu0 0.0
    %1415 = vmatpush2.msra.mxu0 0.0
    %1416 = vmatprep.subr.mxu0 0.0
    %1417 = vmatpush2.msra.mxu0 0.0
    %1418 = vmatprep.subr.mxu0 0.0
    %1419 = vmatpush2.msra.mxu0 0.0
    %1420 = vmatprep.subr.mxu0 0.0
    %1421 = vmatpush2.msra.mxu0 0.0
    %1422 = vmatprep.subr.mxu0 0.0
    %1423 = vmatpush2.msra.mxu0 0.0
    %1424 = vmatprep.subr.mxu0 0.0
    %1425 = vmatpush2.msra.mxu0 0.0
    %1426 = vmatprep.subr.mxu0 0.0
    %1427 = vmatpush2.msra.mxu0 0.0
    %1428 = vmatprep.mubr.f32.mxu0 0.0
    %1429 = vmatmul.mubr.f32.gmra.mxu0 %v1362
    %v1430 = vpop.f32.mrf.mxu0
    %v1431 = vadd.f32 0.0, %v1430
    %v1432 = vpop.f32.mrf.mxu0
    %1433 = vdwg.mxu0
    %v1435 = vrot.slane %v1431, 4
    %v1437 = vadd.f32 %v895, %v1435
    %v1438 = vtanh.pop %v1437
    %v1440 = vrot.slane %v1438, 4
    %v1441 = vsel %vm167, %v1440, 0
    %1443 = vmatprep.subr.mxu0 0.0
    %1444 = vmatpush1.msra.mxu0 0.0
    %1445 = vmatprep.subr.mxu0 0.0
    %1446 = vmatpush1.msra.mxu0 0.0
    %1447 = vmatprep.subr.mxu0 0.0
    %1448 = vmatpush1.msra.mxu0 0.0
    %1449 = vmatprep.subr.mxu0 0.0
    %1450 = vmatpush1.msra.mxu0 0.0
    %1451 = vmatprep.subr.mxu0 0.0
    %1452 = vmatpush1.msra.mxu0 0.0
    %1453 = vmatprep.subr.mxu0 0.0
    %1454 = vmatpush1.msra.mxu0 0.0
    %1455 = vmatprep.subr.mxu0 0.0
    %1456 = vmatpush1.msra.mxu0 0.0
    %1457 = vmatprep.subr.mxu0 0.0
    %1458 = vmatpush1.msra.mxu0 0.0
    %1459 = vmatprep.subr.mxu0 0.0
    %1460 = vmatpush1.msra.mxu0 0.0
    %1461 = vmatprep.subr.mxu0 0.0
    %1462 = vmatpush1.msra.mxu0 0.0
    %1463 = vmatprep.subr.mxu0 0.0
    %1464 = vmatpush1.msra.mxu0 0.0
    %1465 = vmatprep.subr.mxu0 0.0
    %1466 = vmatpush1.msra.mxu0 0.0
    %1467 = vmatprep.subr.mxu0 0.0
    %1468 = vmatpush1.msra.mxu0 %v809
    %1469 = vmatprep.subr.mxu0 0.0
    %1470 = vmatpush1.msra.mxu0 %v808
    %1471 = vmatprep.subr.mxu0 0.0
    %1472 = vmatpush1.msra.mxu0 %v807
    %1473 = vmatprep.subr.mxu0 0.0
    %1474 = vmatpush1.msra.mxu0 %v806
    %1475 = vmatprep.subr.mxu0 0.0
    %1476 = vmatpush2.msra.mxu0 0.0
    %1477 = vmatprep.subr.mxu0 0.0
    %1478 = vmatpush2.msra.mxu0 0.0
    %1479 = vmatprep.subr.mxu0 0.0
    %1480 = vmatpush2.msra.mxu0 0.0
    %1481 = vmatprep.subr.mxu0 0.0
    %1482 = vmatpush2.msra.mxu0 0.0
    %1483 = vmatprep.subr.mxu0 0.0
    %1484 = vmatpush2.msra.mxu0 0.0
    %1485 = vmatprep.subr.mxu0 0.0
    %1486 = vmatpush2.msra.mxu0 0.0
    %1487 = vmatprep.subr.mxu0 0.0
    %1488 = vmatpush2.msra.mxu0 0.0
    %1489 = vmatprep.subr.mxu0 0.0
    %1490 = vmatpush2.msra.mxu0 0.0
    %1491 = vmatprep.subr.mxu0 0.0
    %1492 = vmatpush2.msra.mxu0 0.0
    %1493 = vmatprep.subr.mxu0 0.0
    %1494 = vmatpush2.msra.mxu0 0.0
    %1495 = vmatprep.subr.mxu0 0.0
    %1496 = vmatpush2.msra.mxu0 0.0
    %1497 = vmatprep.subr.mxu0 0.0
    %1498 = vmatpush2.msra.mxu0 0.0
    %1499 = vmatprep.subr.mxu0 0.0
    %1500 = vmatpush2.msra.mxu0 0.0
    %1501 = vmatprep.subr.mxu0 0.0
    %1502 = vmatpush2.msra.mxu0 0.0
    %1503 = vmatprep.subr.mxu0 0.0
    %1504 = vmatpush2.msra.mxu0 0.0
    %1505 = vmatprep.subr.mxu0 0.0
    %1506 = vmatpush2.msra.mxu0 0.0
    %1507 = vmatprep.mubr.f32.mxu0 0.0
    %1508 = vmatmul.mubr.f32.gmra.mxu0 %v1441
    %v1509 = vpop.f32.mrf.mxu0
    %v1510 = vadd.f32 0.0, %v1509
    %v1511 = vpop.f32.mrf.mxu0
    %1512 = vdwg.mxu0
    %v1514 = vrot.slane %v1510, 2
    %v1516 = vadd.f32 %v895, %v1514
    %v1517 = vtanh.pop %v1516
    %v1518 = vsel %vm791, %v969, %v1047
    %v1519 = vsel %vm793, %v1518, %v1126
    %v1520 = vsel %vm795, %v1519, %v1205
    %v1521 = vsel %vm791, %v1281, %v1359
    %v1522 = vsel %vm793, %v1521, %v1438
    %v1523 = vsel %vm795, %v1522, %v1517
    %1524 = vst.msk [vmem:[#allocation9 - $0x4] sm:$0xc0] %vm800, %v1517
    %1525 = vst.msk [vmem:[#allocation8] sm:$0xff] %vm167, %v1520
    %1526 = vst.msk [vmem:[#allocation8 + $0x8] sm:$0xff] %vm167, %v1523
    // Predicated region
    $region42: #{tpu_custom_call.1} parent=1 // pred_check
      _
    $region43: #{tpu_custom_call.1} parent=1 // pred_check_branch
      %1528 = sbr.rel (0) target = $region45
    $region44: #{tpu_custom_call.1} parent=1 // pred_region
      %s1530 = ssub.s32 256, 256
      %1531 = vsyncadd [#allocation4], %s1530
      %s1532 = sshll.u32 [#allocation8], 4
      %s1533 = int_to_ptr.vmem [resolvable:$true] %s1532
      %1538 = dma.vmem_to_hbm [thread:$0]  %s1533, 256, %s7, [#allocation4], 128, 128, 8
    $region45: #{tpu_custom_call.1} parent=1 // pred_fallthru
      _
    // Predicated region
    $region46: #{tpu_custom_call.1} parent=1 // pred_check
      _
    $region47: #{tpu_custom_call.1} parent=1 // pred_check_branch
      %1540 = sbr.rel (0) target = $region49
    $region48: #{tpu_custom_call.1} parent=1 // pred_region
      %s1542 = ssub.s32 64, 64
      %1543 = vsyncadd [#allocation10], %s1542
      %s1545 = sshll.u32 [#allocation9], 4
      %s1546 = int_to_ptr.vmem [resolvable:$true] %s1545
      %1548 = dma.vmem_to_hbm [thread:$0]  %s1546, 64, %s8, [#allocation10]
    $region49: #{tpu_custom_call.1} parent=1 // pred_fallthru
      _
    // Predicated region
    $region50: #{tpu_custom_call.1} parent=1 // pred_check
      _
    $region51: #{tpu_custom_call.1} parent=1 // pred_check_branch
      %1550 = sbr.rel (0) target = $region53
    $region52: #{tpu_custom_call.1} parent=1 // pred_region
      %1551 = dma.done [#allocation4], 256
    $region53: #{tpu_custom_call.1} parent=1 // pred_fallthru
      _
    // Predicated region
    $region54: #{tpu_custom_call.1} parent=1 // pred_check
      _
    $region55: #{tpu_custom_call.1} parent=1 // pred_check_branch
      %1553 = sbr.rel (0) target = $region57
    $region56: #{tpu_custom_call.1} parent=1 // pred_region
      %1554 = dma.done [#allocation10], 64
    $region57: #{tpu_custom_call.1} parent=1 // pred_fallthru
      _
    %1555 = vsyncpa [#allocation3], 1
    %1556 = vsyncpa [#allocation6], 1
    %1557 = vsyncpa [#allocation4], 1
    %1558 = vsyncpa [#allocation10], 1

</llo_original>
